<compile_context>
chip_gen: v7x
topology: tpu7x:2x2x1
jax: 0.10.0
libtpu: 0.0.40
codegen_flags: <defaults>
</compile_context>

<pallas_src>
import jax
import jax.numpy as jnp
from jax.experimental import pallas as pl
from jax.experimental.pallas import tpu as pltpu

_LANES = 128


def _round_up(x, m):
    return -(-x // m) * m


def _edge_kernel(src_ref, dst_ref, w1_ref, b1_ref, w2_ref, b2_ref, out_ref):
    src = src_ref[...]                                  # [T, L] packed src features
    dif = (src - dst_ref[...]).astype(jnp.bfloat16)     # bf16 MXU operand

    # Layer 1 (block-diagonal): per-edge Linear(in_dim, out_dim) + ReLU, f32 acc.
    h = jnp.dot(dif, w1_ref[...], preferred_element_type=jnp.float32)
    h = jnp.maximum(h + b1_ref[...], 0.0)               # b1 tiled to [1, pack*out]

    # Layer 2 (block-diagonal, columns replicated): per-edge Linear(out_dim, 1)
    # + ReLU; scalar logit lands already broadcast over that edge's in_dim lanes.
    a = jnp.dot(h.astype(jnp.bfloat16), w2_ref[...],
                preferred_element_type=jnp.float32)
    a = jnp.maximum(a + b2_ref[0], 0.0)                 # b2 scalar from SMEM

    # sigmoid(a) = 1 / (1 + exp(-a)); a >= 0 after ReLU so exp(-a) in (0, 1].
    # exp + approx reciprocal both use the EUP slot (VPU stays free).
    att = pl.reciprocal(1.0 + jnp.exp(-a), approx=True)

    out_ref[...] = (att * src).astype(out_ref.dtype)    # gate source features


def pack_edge_mlp_params(w1, b1, w2, b2):
    """Build the packed block-diagonal weights ONCE per parameter set
    (hoisted out of the per-call path)."""
    d_in, d_out = w1.shape
    pack = _LANES // d_in if (d_in <= _LANES and _LANES % d_in == 0) else 1
    eye_p = jnp.eye(pack, dtype=jnp.float32)
    w1_bd = jnp.kron(eye_p, w1.astype(jnp.float32)).astype(jnp.bfloat16)
    w2_rep = jnp.kron(eye_p,
                      jnp.tile(w2.astype(jnp.float32), (1, d_in))
                      ).astype(jnp.bfloat16)
    b1_p = jnp.tile(b1.reshape(1, d_out).astype(jnp.float32), (1, pack))
    b2_s = b2.reshape(1).astype(jnp.float32)
    return pack, (w1_bd, b1_p, w2_rep, b2_s)


def edge_distances_passing_packed(src_feat, dst_feat, pack, packed, *,
                                  tile_rows=4096, min_steps=8):
    """src_feat, dst_feat: [E, in_dim] (bf16 preferred, f32 also works).
    Returns feature_n: [E, in_dim] in the input dtype."""
    E, d_in = src_feat.shape
    w1_bd, b1_p, w2_rep, b2_s = packed
    lanes_in = pack * d_in
    lanes_h = w1_bd.shape[1]

    # Only pad E up to a multiple of `pack` (< pack dummy edges) so the packed
    # reshape is valid. The ragged row tail is handled in-kernel by the
    # pl.cdiv grid (OOB writes dropped), avoiding a full-array pad copy.
    e_packed = _round_up(E, pack)
    if e_packed != E:
        padding = ((0, e_packed - E), (0, 0))
        src_feat = jnp.pad(src_feat, padding)
        dst_feat = jnp.pad(dst_feat, padding)
    rows = e_packed // pack

    # Tile sizing: multiple of 16 (bf16 (16,128) tiling); clamp so the grid
    # keeps >= min_steps steps (v7x megacore + pipeline overlap for small E)
    # while large E gets ~1 MiB/stream tiles to amortize grid-step overhead.
    tile_rows = min(tile_rows, _round_up(pl.cdiv(rows, min_steps), 16))
    tile_rows = max(16, _round_up(tile_rows, 16))

    # Lane-dense packed views: row r holds edges [r*pack, (r+1)*pack).
    src_p = src_feat.reshape(rows, lanes_in)
    dst_p = dst_feat.reshape(rows, lanes_in)

    grid = (pl.cdiv(rows, tile_rows),)
    # NOTE: pipeline_mode=pl.Buffered(3) on src/dst is a possible v7x win once
    # measured; left at the default double buffer here.
    out_p = pl.pallas_call(
        _edge_kernel,
        out_shape=jax.ShapeDtypeStruct((rows, lanes_in), src_feat.dtype),
        grid_spec=pltpu.PrefetchScalarGridSpec(
            num_scalar_prefetch=0,
            grid=grid,
            in_specs=[
                pl.BlockSpec((tile_rows, lanes_in), lambda i: (i, 0)),   # src
                pl.BlockSpec((tile_rows, lanes_in), lambda i: (i, 0)),   # dst
                pl.BlockSpec((lanes_in, lanes_h), lambda i: (0, 0)),     # W1 blkdiag (bf16)
                pl.BlockSpec((1, lanes_h), lambda i: (0, 0)),            # b1 tiled (f32)
                pl.BlockSpec((lanes_h, lanes_in), lambda i: (0, 0)),     # W2 replicated (bf16)
                pl.BlockSpec(memory_space=pltpu.MemorySpace.SMEM),       # b2 scalar
            ],
            out_specs=pl.BlockSpec((tile_rows, lanes_in), lambda i: (i, 0)),
        ),
        compiler_params=pltpu.CompilerParams(
            dimension_semantics=("parallel",),
            vmem_limit_bytes=32 << 20),
    )(src_p, dst_p, w1_bd, b1_p, w2_rep, b2_s)

    out = out_p.reshape(e_packed, d_in)
    return out if e_packed == E else out[:E]


def make_edge_distances_passing(w1, b1, w2, b2, *, tile_rows=4096):
    """Packs the MLP weights once and returns a jitted forward over
    (src_feat, dst_feat)."""
    pack, packed = pack_edge_mlp_params(w1, b1, w2, b2)

    @jax.jit
    def fwd(src_feat, dst_feat):
        return edge_distances_passing_packed(
            src_feat, dst_feat, pack, packed, tile_rows=tile_rows)

    return fwd


def _reference(src_feat, dst_feat, w1, b1, w2, b2):
    dif = src_feat - dst_feat
    h = jnp.maximum(dif @ w1 + b1, 0.0)
    a = jnp.maximum(h @ w2 + b2, 0.0)
    a = jax.nn.sigmoid(a)
    return a * src_feat


if __name__ == "__main__":
    key = jax.random.PRNGKey(0)
    k_src, k_dst, k_w1, k_b1, k_w2, k_b2 = jax.random.split(key, 6)

    # Modest edge set; E is deliberately NOT a multiple of pack*tile_rows so the
    # ragged-tail path (in-kernel masking, no full-array pad) is exercised.
    E, in_dim, out_dim = 8195, 32, 32

    src32 = jax.random.normal(k_src, (E, in_dim), dtype=jnp.float32)
    dst32 = jax.random.normal(k_dst, (E, in_dim), dtype=jnp.float32)

    # nn.Linear(in_dim, out_dim) / nn.Linear(out_dim, 1) params stored (in, out)
    # so y = x @ W + b.
    w1 = jax.random.normal(k_w1, (in_dim, out_dim), dtype=jnp.float32) * 0.1
    b1 = jax.random.normal(k_b1, (out_dim,), dtype=jnp.float32) * 0.1
    w2 = jax.random.normal(k_w2, (out_dim, 1), dtype=jnp.float32) * 0.1
    b2 = jax.random.normal(k_b2, (1,), dtype=jnp.float32) * 0.1

    # bf16 edge features: halves HBM traffic for this memory-bound kernel.
    src_feat = src32.astype(jnp.bfloat16)
    dst_feat = dst32.astype(jnp.bfloat16)

    fwd = make_edge_distances_passing(w1, b1, w2, b2)
    out = jax.block_until_ready(fwd(src_feat, dst_feat))

    # f32 reference on the same (bf16-rounded) inputs; tolerance loosened for
    # bf16 I/O + bf16 MXU operands.
    ref = _reference(src_feat.astype(jnp.float32), dst_feat.astype(jnp.float32),
                     w1, b1, w2, b2)
    assert out.shape == (E, in_dim)
    assert out.dtype == jnp.bfloat16
    max_err = float(jnp.max(jnp.abs(out.astype(jnp.float32) - ref)))
    assert jnp.allclose(out.astype(jnp.float32), ref, atol=5e-2, rtol=5e-2), max_err

    print("KERNEL_OK")
</pallas_src>

<mosaic_0001>
module attributes {stable_mosaic.version = 11 : i64} {
  func.func @_edge_kernel(%arg0: i32, %arg1: memref<272x128xbf16, #tpu.memory_space<vmem>>, %arg2: memref<272x128xbf16, #tpu.memory_space<vmem>>, %arg3: memref<128x128xbf16, #tpu.memory_space<vmem>>, %arg4: memref<1x128xf32, #tpu.memory_space<vmem>>, %arg5: memref<128x128xbf16, #tpu.memory_space<vmem>>, %arg6: memref<1xf32, #tpu.memory_space<smem>>, %arg7: memref<272x128xbf16, #tpu.memory_space<vmem>>) attributes {dimension_semantics = [#tpu.dimension_semantics<parallel>], iteration_bounds = array<i64: 8>, scalar_prefetch = 0 : i64, scratch_operands = 0 : i64, tpu.core_type = #tpu.core_type<tc>, window_params = [{transform_indices = @transform_0, window_bounds = array<i64: 272, 128>}, {transform_indices = @transform_1, window_bounds = array<i64: 272, 128>}, {pipeline_mode = #tpu.pipeline_mode<synchronous>, transform_indices = @transform_2, window_bounds = array<i64: 128, 128>}, {pipeline_mode = #tpu.pipeline_mode<synchronous>, transform_indices = @transform_3, window_bounds = array<i64: 1, 128>}, {pipeline_mode = #tpu.pipeline_mode<synchronous>, transform_indices = @transform_4, window_bounds = array<i64: 128, 128>}, {transform_indices = @transform_5, window_bounds = array<i64: 1>}, {transform_indices = @transform_6, window_bounds = array<i64: 272, 128>}]} {
    %c0 = arith.constant 0 : index
    %c0_0 = arith.constant 0 : index
    %0 = vector.load %arg1[%c0, %c0_0] : memref<272x128xbf16, #tpu.memory_space<vmem>>, vector<272x128xbf16>
    %c0_1 = arith.constant 0 : index
    %c0_2 = arith.constant 0 : index
    %1 = vector.load %arg2[%c0_1, %c0_2] : memref<272x128xbf16, #tpu.memory_space<vmem>>, vector<272x128xbf16>
    %2 = arith.subf %0, %1 : vector<272x128xbf16>
    %c0_3 = arith.constant 0 : index
    %c0_4 = arith.constant 0 : index
    %3 = vector.load %arg3[%c0_3, %c0_4] : memref<128x128xbf16, #tpu.memory_space<vmem>>, vector<128x128xbf16>
    %cst = arith.constant dense<0.000000e+00> : vector<272x128xf32>
    %4 = tpu.matmul %2, %3, %cst {dimension_numbers = #tpu.dot_dimension_numbers<[1], [0], [0], [1], [0, 0, 1, 1], [], []>} : vector<272x128xbf16>, vector<128x128xbf16>, vector<272x128xf32> -> vector<272x128xf32>
    %c0_5 = arith.constant 0 : index
    %c0_6 = arith.constant 0 : index
    %5 = vector.load %arg4[%c0_5, %c0_6] : memref<1x128xf32, #tpu.memory_space<vmem>>, vector<1x128xf32>
    %6 = vector.broadcast %5 : vector<1x128xf32> to vector<272x128xf32>
    %7 = arith.addf %4, %6 : vector<272x128xf32>
    %cst_7 = arith.constant 0.000000e+00 : f32
    %8 = vector.broadcast %cst_7 : f32 to vector<272x128xf32>
    %9 = arith.maximumf %7, %8 : vector<272x128xf32>
    %10 = arith.truncf %9 : vector<272x128xf32> to vector<272x128xbf16>
    %c0_8 = arith.constant 0 : index
    %c0_9 = arith.constant 0 : index
    %11 = vector.load %arg5[%c0_8, %c0_9] : memref<128x128xbf16, #tpu.memory_space<vmem>>, vector<128x128xbf16>
    %cst_10 = arith.constant dense<0.000000e+00> : vector<272x128xf32>
    %12 = tpu.matmul %10, %11, %cst_10 {dimension_numbers = #tpu.dot_dimension_numbers<[1], [0], [0], [1], [0, 0, 1, 1], [], []>} : vector<272x128xbf16>, vector<128x128xbf16>, vector<272x128xf32> -> vector<272x128xf32>
    %c0_11 = arith.constant 0 : index
    %13 = memref.load %arg6[%c0_11] : memref<1xf32, #tpu.memory_space<smem>>
    %14 = vector.broadcast %13 : f32 to vector<272x128xf32>
    %15 = arith.addf %12, %14 : vector<272x128xf32>
    %cst_12 = arith.constant 0.000000e+00 : f32
    %16 = vector.broadcast %cst_12 : f32 to vector<272x128xf32>
    %17 = arith.maximumf %15, %16 : vector<272x128xf32>
    %cst_13 = arith.constant 0.000000e+00 : f32
    %18 = vector.broadcast %cst_13 : f32 to vector<272x128xf32>
    %19 = arith.subf %18, %17 : vector<272x128xf32>
    %20 = math.exp %19 : vector<272x128xf32>
    %cst_14 = arith.constant 1.000000e+00 : f32
    %21 = vector.broadcast %cst_14 : f32 to vector<272x128xf32>
    %22 = arith.addf %21, %20 : vector<272x128xf32>
    %23 = tpu.reciprocal %22 {approx = true} : vector<272x128xf32> -> vector<272x128xf32>
    %24 = arith.extf %0 : vector<272x128xbf16> to vector<272x128xf32>
    %25 = arith.mulf %23, %24 : vector<272x128xf32>
    %26 = arith.truncf %25 : vector<272x128xf32> to vector<272x128xbf16>
    %c0_15 = arith.constant 0 : index
    %c0_16 = arith.constant 0 : index
    %27 = vector.load %arg7[%c0_15, %c0_16] : memref<272x128xbf16, #tpu.memory_space<vmem>>, vector<272x128xbf16>
    tpu.vector_store %arg7[%c0_15, %c0_16], %26 {strides = array<i32>} : memref<272x128xbf16, #tpu.memory_space<vmem>>, vector<272x128xbf16>,
    return
  }
  func.func @transform_0(%arg0: i32) -> (i32, i32) {
    %c0_i32 = arith.constant 0 : i32
    %c0_i32_0 = arith.constant 0 : i32
    return %arg0, %c0_i32 : i32, i32
  }
  func.func @transform_1(%arg0: i32) -> (i32, i32) {
    %c0_i32 = arith.constant 0 : i32
    %c0_i32_0 = arith.constant 0 : i32
    return %arg0, %c0_i32 : i32, i32
  }
  func.func @transform_2(%arg0: i32) -> (i32, i32) {
    %c0_i32 = arith.constant 0 : i32
    %c0_i32_0 = arith.constant 0 : i32
    %c0_i32_1 = arith.constant 0 : i32
    return %c0_i32, %c0_i32_0 : i32, i32
  }
  func.func @transform_3(%arg0: i32) -> (i32, i32) {
    %c0_i32 = arith.constant 0 : i32
    %c0_i32_0 = arith.constant 0 : i32
    %c0_i32_1 = arith.constant 0 : i32
    return %c0_i32, %c0_i32_0 : i32, i32
  }
  func.func @transform_4(%arg0: i32) -> (i32, i32) {
    %c0_i32 = arith.constant 0 : i32
    %c0_i32_0 = arith.constant 0 : i32
    %c0_i32_1 = arith.constant 0 : i32
    return %c0_i32, %c0_i32_0 : i32, i32
  }
  func.func @transform_5(%arg0: i32) -> i32 {
    %c0_i32 = arith.constant 0 : i32
    %c0_i32_0 = arith.constant 0 : i32
    return %c0_i32 : i32
  }
  func.func @transform_6(%arg0: i32) -> (i32, i32) {
    %c0_i32 = arith.constant 0 : i32
    %c0_i32_0 = arith.constant 0 : i32
    return %arg0, %c0_i32 : i32, i32
  }
}

</mosaic_0001>

<llo_original>
// kernel: fwd.1
$region0: #{fwd.1}
  #allocation0 [shape = 'u32[]', space=smem, size = 0x4, offset = 0x4, fixed_abs, tag = 'smem constant byte address 0x4 - core index']
  #allocation1 [shape = 'u32[144,128]{1,0:T(1,128)}', space=vmem, size = 0x12000, scoped, tag = 'internal scratch']
  #allocation2 [shape = 'f32[1]{0:T(128)S(6)}', space=smem, size = 0x200, scoped, tag = 'scoped memory for fwd.1']
  %s0 = inlined_call_operand.vmem [shape: bf16[2049,128], index: 0, kind: input, shape index: {}]
  %s1 = inlined_call_operand.vmem [shape: bf16[2049,128], index: 1, kind: input, shape index: {}]
  %s2 = inlined_call_operand.vmem [shape: bf16[128,128], index: 2, kind: input, shape index: {}]
  %s3 = inlined_call_operand.vmem [shape: f32[1,128], index: 3, kind: input, shape index: {}]
  %s4 = inlined_call_operand.vmem [shape: bf16[128,128], index: 4, kind: input, shape index: {}]
  %s5 = inlined_call_operand.<no memory space> [shape: f32[1], index: 5, kind: input, shape index: {}]
  %s6 = inlined_call_operand.vmem [shape: bf16[2049,128], index: 6, kind: output, shape index: {}]
  %s7 = sld [smem:[#allocation0]]
  $region101: #{fwd.1} parent=0
    _
  %s9 = ssub.s32 1, %s7
  %s10 = scalar_select 0, %s9, %s7
  %11 = sst [smem:[#allocation2]] %s5
  $region1: #{fwd.1} parent=0
    #allocation3 [shape = 'u8[139264]{0}', space=vmem, size = 0x22000, scoped, tag = 'output window, operand 0']
    loop: start=0, step=1, limit=10
    $region2: #{fwd.1} parent=1 // loop_pre_header
      _
    $region3: #{fwd.1} parent=1 // loop_header
      %s13 = sphi 0, %s17
      %p14 = scmp.ge.s32.totalorder %s13, 10
      %s23 = sphi 0, %s25
      %s26 = sphi 0, %s23
      %s27 = sphi 0, %s26
      %s43 = sphi 0, %s27
      %s49 = sphi 0, %s51
      %s52 = sphi 0, %s49
      %s53 = sphi 0, %s52
      %s69 = sphi 0, %s53
      %s73 = sphi 0, %s73
      %s75 = sphi 0, %s73
      %s76 = sphi 0, %s75
      %s90 = sphi 0, %s76
      %s94 = sphi 0, %s94
      %s96 = sphi 0, %s94
      %s97 = sphi 0, %s96
      %s111 = sphi 0, %s97
      %s115 = sphi 0, %s115
      %s117 = sphi 0, %s115
      %s118 = sphi 0, %s117
      %s132 = sphi 0, %s118
      %s136 = sphi 0, %s136
      %s138 = sphi 0, %s136
      %s139 = sphi 0, %s138
      %s153 = sphi 0, %s139
      %s159 = sphi 0, %s161
      %s162 = sphi 0, %s159
      %s163 = sphi 0, %s162
      %s179 = sphi 0, %s163
    $region4: #{fwd.1} parent=1 // loop_header_branch
      %16 = sbr.rel (%p14) target = $region8
    $region5: #{fwd.1} parent=1 // loop_body
      %s18 = ssub.s32 %s13, 1
      %s19 = ssub.s32 %s13, 2
      %s20 = sadd.s32 %s13, 1
      %s21 = ssub.s32 %s13, %s20
      %p22 = scmp.eq.s32.totalorder %s21, 0
      %s24 = sadd.s32 %s23, 1
      %s25 = scalar_select %p22, %s23, %s24
      %p28 = pneg %p22
      %p29 = scmp.eq.s32.totalorder %s13, 7
      %p30 = por %p28, %p29
      %p31 = scmp.ne.s32.totalorder %s23, %s26
      %p32 = scmp.eq.s32.totalorder %s13, 0
      %p33 = por %p31, %p32
      %p34 = scmp.ne.s32.totalorder %s23, %s26
      %p35 = scmp.eq.s32.totalorder %s18, 7
      %p36 = por %p34, %p35
      %p37 = scmp.ne.s32.totalorder %s26, %s27
      %p38 = scmp.eq.s32.totalorder %s18, 0
      %p39 = por %p37, %p38
      %p40 = scmp.ne.s32.totalorder %s26, %s27
      %p41 = scmp.eq.s32.totalorder %s19, 7
      %p42 = por %p40, %p41
      %p44 = scmp.ne.s32.totalorder %s27, %s43
      %p45 = scmp.eq.s32.totalorder %s19, 0
      %p46 = por %p44, %p45
      %s47 = ssub.s32 %s13, %s20
      %p48 = scmp.eq.s32.totalorder %s47, 0
      %s50 = sadd.s32 %s49, 1
      %s51 = scalar_select %p48, %s49, %s50
      %p54 = pneg %p48
      %p55 = scmp.eq.s32.totalorder %s13, 7
      %p56 = por %p54, %p55
      %p57 = scmp.ne.s32.totalorder %s49, %s52
      %p58 = scmp.eq.s32.totalorder %s13, 0
      %p59 = por %p57, %p58
      %p60 = scmp.ne.s32.totalorder %s49, %s52
      %p61 = scmp.eq.s32.totalorder %s18, 7
      %p62 = por %p60, %p61
      %p63 = scmp.ne.s32.totalorder %s52, %s53
      %p64 = scmp.eq.s32.totalorder %s18, 0
      %p65 = por %p63, %p64
      %p66 = scmp.ne.s32.totalorder %s52, %s53
      %p67 = scmp.eq.s32.totalorder %s19, 7
      %p68 = por %p66, %p67
      %p70 = scmp.ne.s32.totalorder %s53, %s69
      %p71 = scmp.eq.s32.totalorder %s19, 0
      %p72 = por %p70, %p71
      %s74 = sadd.s32 %s73, 1
      %p77 = scmp.eq.s32.totalorder %s13, 7
      %p78 = scmp.ne.s32.totalorder %s73, %s75
      %p79 = scmp.eq.s32.totalorder %s13, 0
      %p80 = por %p78, %p79
      %p81 = scmp.ne.s32.totalorder %s73, %s75
      %p82 = scmp.eq.s32.totalorder %s18, 7
      %p83 = por %p81, %p82
      %p84 = scmp.ne.s32.totalorder %s75, %s76
      %p85 = scmp.eq.s32.totalorder %s18, 0
      %p86 = por %p84, %p85
      %p87 = scmp.ne.s32.totalorder %s75, %s76
      %p88 = scmp.eq.s32.totalorder %s19, 7
      %p89 = por %p87, %p88
      %p91 = scmp.ne.s32.totalorder %s76, %s90
      %p92 = scmp.eq.s32.totalorder %s19, 0
      %p93 = por %p91, %p92
      %s95 = sadd.s32 %s94, 1
      %p98 = scmp.eq.s32.totalorder %s13, 7
      %p99 = scmp.ne.s32.totalorder %s94, %s96
      %p100 = scmp.eq.s32.totalorder %s13, 0
      %p101 = por %p99, %p100
      %p102 = scmp.ne.s32.totalorder %s94, %s96
      %p103 = scmp.eq.s32.totalorder %s18, 7
      %p104 = por %p102, %p103
      %p105 = scmp.ne.s32.totalorder %s96, %s97
      %p106 = scmp.eq.s32.totalorder %s18, 0
      %p107 = por %p105, %p106
      %p108 = scmp.ne.s32.totalorder %s96, %s97
      %p109 = scmp.eq.s32.totalorder %s19, 7
      %p110 = por %p108, %p109
      %p112 = scmp.ne.s32.totalorder %s97, %s111
      %p113 = scmp.eq.s32.totalorder %s19, 0
      %p114 = por %p112, %p113
      %s116 = sadd.s32 %s115, 1
      %p119 = scmp.eq.s32.totalorder %s13, 7
      %p120 = scmp.ne.s32.totalorder %s115, %s117
      %p121 = scmp.eq.s32.totalorder %s13, 0
      %p122 = por %p120, %p121
      %p123 = scmp.ne.s32.totalorder %s115, %s117
      %p124 = scmp.eq.s32.totalorder %s18, 7
      %p125 = por %p123, %p124
      %p126 = scmp.ne.s32.totalorder %s117, %s118
      %p127 = scmp.eq.s32.totalorder %s18, 0
      %p128 = por %p126, %p127
      %p129 = scmp.ne.s32.totalorder %s117, %s118
      %p130 = scmp.eq.s32.totalorder %s19, 7
      %p131 = por %p129, %p130
      %p133 = scmp.ne.s32.totalorder %s118, %s132
      %p134 = scmp.eq.s32.totalorder %s19, 0
      %p135 = por %p133, %p134
      %s137 = sadd.s32 %s136, 1
      %p140 = scmp.eq.s32.totalorder %s13, 7
      %p141 = scmp.ne.s32.totalorder %s136, %s138
      %p142 = scmp.eq.s32.totalorder %s13, 0
      %p143 = por %p141, %p142
      %p144 = scmp.ne.s32.totalorder %s136, %s138
      %p145 = scmp.eq.s32.totalorder %s18, 7
      %p146 = por %p144, %p145
      %p147 = scmp.ne.s32.totalorder %s138, %s139
      %p148 = scmp.eq.s32.totalorder %s18, 0
      %p149 = por %p147, %p148
      %p150 = scmp.ne.s32.totalorder %s138, %s139
      %p151 = scmp.eq.s32.totalorder %s19, 7
      %p152 = por %p150, %p151
      %p154 = scmp.ne.s32.totalorder %s139, %s153
      %p155 = scmp.eq.s32.totalorder %s19, 0
      %p156 = por %p154, %p155
      %s157 = ssub.s32 %s13, %s20
      %p158 = scmp.eq.s32.totalorder %s157, 0
      %s160 = sadd.s32 %s159, 1
      %s161 = scalar_select %p158, %s159, %s160
      %p164 = pneg %p158
      %p165 = scmp.eq.s32.totalorder %s13, 7
      %p166 = por %p164, %p165
      %p167 = scmp.ne.s32.totalorder %s159, %s162
      %p168 = scmp.eq.s32.totalorder %s13, 0
      %p169 = por %p167, %p168
      %p170 = scmp.ne.s32.totalorder %s159, %s162
      %p171 = scmp.eq.s32.totalorder %s18, 7
      %p172 = por %p170, %p171
      %p173 = scmp.ne.s32.totalorder %s162, %s163
      %p174 = scmp.eq.s32.totalorder %s18, 0
      %p175 = por %p173, %p174
      %p176 = scmp.ne.s32.totalorder %s162, %s163
      %p177 = scmp.eq.s32.totalorder %s19, 7
      %p178 = por %p176, %p177
      %p180 = scmp.ne.s32.totalorder %s163, %s179
      %p181 = scmp.eq.s32.totalorder %s19, 0
      %p182 = por %p180, %p181
      %p183 = scmp.le.s32.totalorder 1, %s13
      %p184 = scmp.lt.s32.totalorder %s13, 9
      %p185 = pnand %p183, %p184
      %p186 = pneg %p185
      // Predicated region
      $region9: #{fwd.1} parent=5 // pred_check
        _
      $region10: #{fwd.1} parent=5 // pred_check_branch
        %188 = sbr.rel (%p185) target = $region12
      $region11: #{fwd.1} parent=5 // pred_region
        %s189 = ssub.s32 %s13, 1
        // Predicated region
        $region13: #{fwd.1} parent=11 // pred_check
          %p190 = pneg %p86
        $region14: #{fwd.1} parent=11 // pred_check_branch
          %192 = sbr.rel (%p190) target = $region16
        $region15: #{fwd.1} parent=11 // pred_region
          _
        $region16: #{fwd.1} parent=11 // pred_fallthru
          _
        // Predicated region
        $region17: #{fwd.1} parent=11 // pred_check
          %p193 = pneg %p107
        $region18: #{fwd.1} parent=11 // pred_check_branch
          %195 = sbr.rel (%p193) target = $region20
        $region19: #{fwd.1} parent=11 // pred_region
          _
        $region20: #{fwd.1} parent=11 // pred_fallthru
          _
        // Predicated region
        $region21: #{fwd.1} parent=11 // pred_check
          %p196 = pneg %p128
        $region22: #{fwd.1} parent=11 // pred_check_branch
          %198 = sbr.rel (%p196) target = $region24
        $region23: #{fwd.1} parent=11 // pred_region
          _
        $region24: #{fwd.1} parent=11 // pred_fallthru
          _
        // Predicated region
        $region25: #{fwd.1} parent=11 // pred_check
          %p199 = pneg %p149
        $region26: #{fwd.1} parent=11 // pred_check_branch
          %201 = sbr.rel (%p199) target = $region28
        $region27: #{fwd.1} parent=11 // pred_region
          _
        $region28: #{fwd.1} parent=11 // pred_fallthru
          _
      $region12: #{fwd.1} parent=5 // pred_fallthru
        _
      %p202 = scmp.lt.s32.totalorder %s13, 8
      // Predicated region
      $region29: #{fwd.1} parent=5 // pred_check
        %p203 = pneg %p202
      $region30: #{fwd.1} parent=5 // pred_check_branch
        %205 = sbr.rel (%p203) target = $region32
      $region31: #{fwd.1} parent=5 // pred_region
        // Predicated region
        $region33: #{fwd.1} parent=31 // pred_check
          %p206 = pneg %p33
        $region34: #{fwd.1} parent=31 // pred_check_branch
          %208 = sbr.rel (%p206) target = $region36
        $region35: #{fwd.1} parent=31 // pred_region
          %s209 = smul.u32 34, %s13
          %s210 = ssub.s32 257, %s209
          %p211 = scmp.lt.s32.totalorder %s210, 34
          %s212 = scalar_select %p211, %s210, 34
          %s213 = smul.u32 64, %s212
          %p214 = scmp.lt.s32.totalorder %s209, 256
          %s215 = scalar_select %p214, %s209, 256
          %s216 = smul.addr %s215, 4
          %s217 = scalar_lea.vmem %s0, %s216
          %s218 = smul.u32 34, %s13
          %s219 = ssub.s32 257, %s218
          %p220 = scmp.lt.s32.totalorder %s219, 34
          %s221 = scalar_select %p220, %s219, 34
          %s222 = smul.u32 64, %s221
        $region36: #{fwd.1} parent=31 // pred_fallthru
          _
        // Predicated region
        $region37: #{fwd.1} parent=31 // pred_check
          %p223 = pneg %p59
        $region38: #{fwd.1} parent=31 // pred_check_branch
          %225 = sbr.rel (%p223) target = $region40
        $region39: #{fwd.1} parent=31 // pred_region
          %s226 = smul.u32 34, %s13
          %s227 = ssub.s32 257, %s226
          %p228 = scmp.lt.s32.totalorder %s227, 34
          %s229 = scalar_select %p228, %s227, 34
          %s230 = smul.u32 64, %s229
          %p231 = scmp.lt.s32.totalorder %s226, 256
          %s232 = scalar_select %p231, %s226, 256
          %s233 = smul.addr %s232, 4
          %s234 = scalar_lea.vmem %s1, %s233
          %s235 = smul.u32 34, %s13
          %s236 = ssub.s32 257, %s235
          %p237 = scmp.lt.s32.totalorder %s236, 34
          %s238 = scalar_select %p237, %s236, 34
          %s239 = smul.u32 64, %s238
        $region40: #{fwd.1} parent=31 // pred_fallthru
          _
      $region32: #{fwd.1} parent=5 // pred_fallthru
        _
      %p240 = scmp.le.s32.totalorder 1, %s13
      %p241 = scmp.lt.s32.totalorder %s13, 9
      %p242 = pnand %p240, %p241
      %p243 = pneg %p242
      // Predicated region
      $region41: #{fwd.1} parent=5 // pred_check
        _
      $region42: #{fwd.1} parent=5 // pred_check_branch
        %245 = sbr.rel (%p242) target = $region44
      $region43: #{fwd.1} parent=5 // pred_region
        %s246 = ssub.s32 %s13, 1
        %s247 = smul.u32 34, %s18
        %s248 = ssub.s32 257, %s247
        %p249 = scmp.lt.s32.totalorder %s248, 34
        %s250 = scalar_select %p249, %s248, 34
        %s251 = smul.u32 64, %s250
        %p252 = scmp.lt.s32.totalorder %s247, 256
        %s253 = scalar_select %p252, %s247, 256
        %s254 = smul.addr %s253, 4
        %s255 = scalar_lea.vmem %s0, %s254
        %p256 = pneg %p39
        %p257 = pneg %p36
        %s258 = smul.u32 34, %s18
        %s259 = ssub.s32 257, %s258
        %p260 = scmp.lt.s32.totalorder %s259, 34
        %s261 = scalar_select %p260, %s259, 34
        %s262 = smul.u32 64, %s261
        %p263 = scmp.lt.s32.totalorder %s258, 256
        %s264 = scalar_select %p263, %s258, 256
        %s265 = smul.addr %s264, 4
        %s266 = scalar_lea.vmem %s1, %s265
        %p267 = pneg %p65
        %p268 = pneg %p62
        %p269 = pneg %p86
        %p270 = pneg %p83
        %p271 = pneg %p107
        %p272 = pneg %p104
        %p273 = pneg %p128
        %p274 = pneg %p125
        %p275 = pneg %p149
        %p276 = pneg %p146
        %p277 = pneg %p175
        %p278 = pneg %p172
        %s279 = sand.u32 %s162, 1
        %s280 = sand.u32 %s162, 1
        %s281 = smul.addr %s280, 136
        %s282 = scalar_lea.vmem [#allocation3], %s281
        %s283 = smul.u32 34, %s18
        %s284 = ssub.s32 257, %s283
        %p285 = scmp.lt.s32.totalorder %s284, 34
        %s286 = scalar_select %p285, %s284, 34
        %s287 = smul.u32 64, %s286
        %p288 = scmp.lt.s32.totalorder %s283, 256
        %s289 = scalar_select %p288, %s283, 256
        %s290 = smul.addr %s289, 4
        %s291 = scalar_lea.vmem %s0, %s290
        %s292 = smul.u32 34, %s18
        %s293 = ssub.s32 257, %s292
        %p294 = scmp.lt.s32.totalorder %s293, 34
        %s295 = scalar_select %p294, %s293, 34
        %s296 = smul.u32 64, %s295
        %s297 = smul.u32 34, %s18
        %s298 = ssub.s32 257, %s297
        %p299 = scmp.lt.s32.totalorder %s298, 34
        %s300 = scalar_select %p299, %s298, 34
        %s301 = smul.u32 64, %s300
        %p302 = scmp.lt.s32.totalorder %s297, 256
        %s303 = scalar_select %p302, %s297, 256
        %s304 = smul.addr %s303, 4
        %s305 = scalar_lea.vmem %s1, %s304
        %s306 = smul.u32 34, %s18
        %s307 = ssub.s32 257, %s306
        %p308 = scmp.lt.s32.totalorder %s307, 34
        %s309 = scalar_select %p308, %s307, 34
        %s310 = smul.u32 64, %s309
        %s311 = smul.u32 34, %s18
        %s312 = ssub.s32 257, %s311
        %p313 = scmp.lt.s32.totalorder %s312, 34
        %s314 = scalar_select %p313, %s312, 34
        %s315 = smul.u32 64, %s314
        %v317 = vld [vmem:[%s291] sm:$0xf]
        %v318 = vld [vmem:[%s291 + $0x4] sm:$0xf]
        %v319 = vld [vmem:[%s291 + $0x8] sm:$0xf]
        %v320 = vld [vmem:[%s291 + $0xc] sm:$0xf]
        %v321 = vld [vmem:[%s291 + $0x10] sm:$0xf]
        %v322 = vld [vmem:[%s291 + $0x14] sm:$0xf]
        %v323 = vld [vmem:[%s291 + $0x18] sm:$0xf]
        %v324 = vld [vmem:[%s291 + $0x1c] sm:$0xf]
        %v325 = vld [vmem:[%s291 + $0x20] sm:$0xf]
        %v326 = vld [vmem:[%s291 + $0x24] sm:$0xf]
        %v327 = vld [vmem:[%s291 + $0x28] sm:$0xf]
        %v328 = vld [vmem:[%s291 + $0x2c] sm:$0xf]
        %v329 = vld [vmem:[%s291 + $0x30] sm:$0xf]
        %v330 = vld [vmem:[%s291 + $0x34] sm:$0xf]
        %v331 = vld [vmem:[%s291 + $0x38] sm:$0xf]
        %v332 = vld [vmem:[%s291 + $0x3c] sm:$0xf]
        %v333 = vld [vmem:[%s291 + $0x40] sm:$0xf]
        %v334 = vld [vmem:[%s291 + $0x44] sm:$0xf]
        %v335 = vld [vmem:[%s291 + $0x48] sm:$0xf]
        %v336 = vld [vmem:[%s291 + $0x4c] sm:$0xf]
        %v337 = vld [vmem:[%s291 + $0x50] sm:$0xf]
        %v338 = vld [vmem:[%s291 + $0x54] sm:$0xf]
        %v339 = vld [vmem:[%s291 + $0x58] sm:$0xf]
        %v340 = vld [vmem:[%s291 + $0x5c] sm:$0xf]
        %v341 = vld [vmem:[%s291 + $0x60] sm:$0xf]
        %v342 = vld [vmem:[%s291 + $0x64] sm:$0xf]
        %v343 = vld [vmem:[%s291 + $0x68] sm:$0xf]
        %v344 = vld [vmem:[%s291 + $0x6c] sm:$0xf]
        %v345 = vld [vmem:[%s291 + $0x70] sm:$0xf]
        %v346 = vld [vmem:[%s291 + $0x74] sm:$0xf]
        %v347 = vld [vmem:[%s291 + $0x78] sm:$0xf]
        %v348 = vld [vmem:[%s291 + $0x7c] sm:$0xf]
        %v349 = vld [vmem:[%s291 + $0x80] sm:$0xf]
        %v350 = vld [vmem:[%s291 + $0x84] sm:$0xf]
        %v351 = vld [vmem:[%s305] sm:$0xf]
        %v352 = vld [vmem:[%s305 + $0x4] sm:$0xf]
        %v353 = vld [vmem:[%s305 + $0x8] sm:$0xf]
        %v354 = vld [vmem:[%s305 + $0xc] sm:$0xf]
        %v355 = vld [vmem:[%s305 + $0x10] sm:$0xf]
        %v356 = vld [vmem:[%s305 + $0x14] sm:$0xf]
        %v357 = vld [vmem:[%s305 + $0x18] sm:$0xf]
        %v358 = vld [vmem:[%s305 + $0x1c] sm:$0xf]
        %v359 = vld [vmem:[%s305 + $0x20] sm:$0xf]
        %v360 = vld [vmem:[%s305 + $0x24] sm:$0xf]
        %v361 = vld [vmem:[%s305 + $0x28] sm:$0xf]
        %v362 = vld [vmem:[%s305 + $0x2c] sm:$0xf]
        %v363 = vld [vmem:[%s305 + $0x30] sm:$0xf]
        %v364 = vld [vmem:[%s305 + $0x34] sm:$0xf]
        %v365 = vld [vmem:[%s305 + $0x38] sm:$0xf]
        %v366 = vld [vmem:[%s305 + $0x3c] sm:$0xf]
        %v367 = vld [vmem:[%s305 + $0x40] sm:$0xf]
        %v368 = vld [vmem:[%s305 + $0x44] sm:$0xf]
        %v369 = vld [vmem:[%s305 + $0x48] sm:$0xf]
        %v370 = vld [vmem:[%s305 + $0x4c] sm:$0xf]
        %v371 = vld [vmem:[%s305 + $0x50] sm:$0xf]
        %v372 = vld [vmem:[%s305 + $0x54] sm:$0xf]
        %v373 = vld [vmem:[%s305 + $0x58] sm:$0xf]
        %v374 = vld [vmem:[%s305 + $0x5c] sm:$0xf]
        %v375 = vld [vmem:[%s305 + $0x60] sm:$0xf]
        %v376 = vld [vmem:[%s305 + $0x64] sm:$0xf]
        %v377 = vld [vmem:[%s305 + $0x68] sm:$0xf]
        %v378 = vld [vmem:[%s305 + $0x6c] sm:$0xf]
        %v379 = vld [vmem:[%s305 + $0x70] sm:$0xf]
        %v380 = vld [vmem:[%s305 + $0x74] sm:$0xf]
        %v381 = vld [vmem:[%s305 + $0x78] sm:$0xf]
        %v382 = vld [vmem:[%s305 + $0x7c] sm:$0xf]
        %v383 = vld [vmem:[%s305 + $0x80] sm:$0xf]
        %v384 = vld [vmem:[%s305 + $0x84] sm:$0xf]
        %v385 = vsub.bf16 %v317, %v351
        %v386 = vsub.bf16 %v318, %v352
        %v387 = vsub.bf16 %v319, %v353
        %v388 = vsub.bf16 %v320, %v354
        %v389 = vsub.bf16 %v321, %v355
        %v390 = vsub.bf16 %v322, %v356
        %v391 = vsub.bf16 %v323, %v357
        %v392 = vsub.bf16 %v324, %v358
        %v393 = vsub.bf16 %v325, %v359
        %v394 = vsub.bf16 %v326, %v360
        %v395 = vsub.bf16 %v327, %v361
        %v396 = vsub.bf16 %v328, %v362
        %v397 = vsub.bf16 %v329, %v363
        %v398 = vsub.bf16 %v330, %v364
        %v399 = vsub.bf16 %v331, %v365
        %v400 = vsub.bf16 %v332, %v366
        %v401 = vsub.bf16 %v333, %v367
        %v402 = vsub.bf16 %v334, %v368
        %v403 = vsub.bf16 %v335, %v369
        %v404 = vsub.bf16 %v336, %v370
        %v405 = vsub.bf16 %v337, %v371
        %v406 = vsub.bf16 %v338, %v372
        %v407 = vsub.bf16 %v339, %v373
        %v408 = vsub.bf16 %v340, %v374
        %v409 = vsub.bf16 %v341, %v375
        %v410 = vsub.bf16 %v342, %v376
        %v411 = vsub.bf16 %v343, %v377
        %v412 = vsub.bf16 %v344, %v378
        %v413 = vsub.bf16 %v345, %v379
        %v414 = vsub.bf16 %v346, %v380
        %v415 = vsub.bf16 %v347, %v381
        %v416 = vsub.bf16 %v348, %v382
        %v417 = vsub.bf16 %v349, %v383
        %v418 = vsub.bf16 %v350, %v384
        %v419 = vld [vmem:[%s2] sm:$0xf]
        %v420 = vld [vmem:[%s2 + $0x4] sm:$0xf]
        %v421 = vld [vmem:[%s2 + $0x8] sm:$0xf]
        %v422 = vld [vmem:[%s2 + $0xc] sm:$0xf]
        %v423 = vld [vmem:[%s2 + $0x10] sm:$0xf]
        %v424 = vld [vmem:[%s2 + $0x14] sm:$0xf]
        %v425 = vld [vmem:[%s2 + $0x18] sm:$0xf]
        %v426 = vld [vmem:[%s2 + $0x1c] sm:$0xf]
        %v427 = vld [vmem:[%s2 + $0x20] sm:$0xf]
        %v428 = vld [vmem:[%s2 + $0x24] sm:$0xf]
        %v429 = vld [vmem:[%s2 + $0x28] sm:$0xf]
        %v430 = vld [vmem:[%s2 + $0x2c] sm:$0xf]
        %v431 = vld [vmem:[%s2 + $0x30] sm:$0xf]
        %v432 = vld [vmem:[%s2 + $0x34] sm:$0xf]
        %v433 = vld [vmem:[%s2 + $0x38] sm:$0xf]
        %v434 = vld [vmem:[%s2 + $0x3c] sm:$0xf]
        %v435 = vld [vmem:[%s3] sm:$0x1]
        %v437 = vlaneseq
        %v438 = vshrl.u32 %v437, 7
        %v439 = vsub.s32 0, %v438
        %v440 = vrot.slane %v435, %v439
        %v476 = vunpack.c.l.b16 %v385
        %v477 = vunpack.c.l.b16 %v386
        %v478 = vunpack.c.l.b16 %v387
        %v479 = vunpack.c.l.b16 %v388
        %v480 = vunpack.c.l.b16 %v389
        %v481 = vunpack.c.l.b16 %v390
        %v482 = vunpack.c.l.b16 %v391
        %v483 = vunpack.c.l.b16 %v392
        %v484 = vunpack.c.l.b16 %v393
        %v485 = vunpack.c.l.b16 %v394
        %v486 = vunpack.c.l.b16 %v395
        %v487 = vunpack.c.l.b16 %v396
        %v488 = vunpack.c.l.b16 %v397
        %v489 = vunpack.c.l.b16 %v398
        %v490 = vunpack.c.l.b16 %v399
        %v491 = vunpack.c.l.b16 %v400
        %v492 = vunpack.c.l.b16 %v401
        %v493 = vunpack.c.l.b16 %v402
        %v494 = vunpack.c.l.b16 %v403
        %v495 = vunpack.c.l.b16 %v404
        %v496 = vunpack.c.l.b16 %v405
        %v497 = vunpack.c.l.b16 %v406
        %v498 = vunpack.c.l.b16 %v407
        %v499 = vunpack.c.l.b16 %v408
        %v500 = vunpack.c.l.b16 %v409
        %v501 = vunpack.c.l.b16 %v410
        %v502 = vunpack.c.l.b16 %v411
        %v503 = vunpack.c.l.b16 %v412
        %v504 = vunpack.c.l.b16 %v413
        %v505 = vunpack.c.l.b16 %v414
        %v506 = vunpack.c.l.b16 %v415
        %v507 = vunpack.c.l.b16 %v416
        %v508 = vunpack.c.l.b16 %v417
        %v509 = vunpack.c.l.b16 %v418
        %v510 = vpack.c.b16 %v477, %v476
        %v511 = vpack.c.b16 %v479, %v478
        %v512 = vpack.c.b16 %v481, %v480
        %v513 = vpack.c.b16 %v483, %v482
        %v514 = vpack.c.b16 %v485, %v484
        %v515 = vpack.c.b16 %v487, %v486
        %v516 = vpack.c.b16 %v489, %v488
        %v517 = vpack.c.b16 %v491, %v490
        %v518 = vpack.c.b16 %v493, %v492
        %v519 = vpack.c.b16 %v495, %v494
        %v520 = vpack.c.b16 %v497, %v496
        %v521 = vpack.c.b16 %v499, %v498
        %v522 = vpack.c.b16 %v501, %v500
        %v523 = vpack.c.b16 %v503, %v502
        %v524 = vpack.c.b16 %v505, %v504
        %v525 = vpack.c.b16 %v507, %v506
        %v526 = vpack.c.b16 %v509, %v508
        %v560 = vunpack.c.l.b16 %v419
        %v561 = vunpack.c.l.b16 %v420
        %v562 = vunpack.c.l.b16 %v421
        %v563 = vunpack.c.l.b16 %v422
        %v564 = vunpack.c.l.b16 %v423
        %v565 = vunpack.c.l.b16 %v424
        %v566 = vunpack.c.l.b16 %v425
        %v567 = vunpack.c.l.b16 %v426
        %v568 = vunpack.c.l.b16 %v427
        %v569 = vunpack.c.l.b16 %v428
        %v570 = vunpack.c.l.b16 %v429
        %v571 = vunpack.c.l.b16 %v430
        %v572 = vunpack.c.l.b16 %v431
        %v573 = vunpack.c.l.b16 %v432
        %v574 = vunpack.c.l.b16 %v433
        %v575 = vunpack.c.l.b16 %v434
        %v576 = vpack.c.b16 %v561, %v560
        %v577 = vpack.c.b16 %v563, %v562
        %v578 = vpack.c.b16 %v565, %v564
        %v579 = vpack.c.b16 %v567, %v566
        %v580 = vpack.c.b16 %v569, %v568
        %v581 = vpack.c.b16 %v571, %v570
        %v582 = vpack.c.b16 %v573, %v572
        %v583 = vpack.c.b16 %v575, %v574
        %592 = vmatprep.subr.bf16.mxu0 0
        %593 = vmatpush1.bf16.msra.mxu0 %v576
        %594 = vmatprep.subr.bf16.mxu0 0
        %595 = vmatpush1.bf16.msra.mxu0 %v577
        %596 = vmatprep.subr.bf16.mxu0 0
        %597 = vmatpush1.bf16.msra.mxu0 %v578
        %598 = vmatprep.subr.bf16.mxu0 0
        %599 = vmatpush1.bf16.msra.mxu0 %v579
        %600 = vmatprep.subr.bf16.mxu0 0
        %601 = vmatpush1.bf16.msra.mxu0 %v580
        %602 = vmatprep.subr.bf16.mxu0 0
        %603 = vmatpush1.bf16.msra.mxu0 %v581
        %604 = vmatprep.subr.bf16.mxu0 0
        %605 = vmatpush1.bf16.msra.mxu0 %v582
        %606 = vmatprep.subr.bf16.mxu0 0
        %607 = vmatpush1.bf16.msra.mxu0 %v583
        %608 = vmatprep.subr.bf16.mxu0 0
        %609 = vmatpush1.bf16.msra.mxu0 0
        %610 = vmatprep.subr.bf16.mxu0 0
        %611 = vmatpush1.bf16.msra.mxu0 0
        %612 = vmatprep.subr.bf16.mxu0 0
        %613 = vmatpush1.bf16.msra.mxu0 0
        %614 = vmatprep.subr.bf16.mxu0 0
        %615 = vmatpush1.bf16.msra.mxu0 0
        %616 = vmatprep.subr.bf16.mxu0 0
        %617 = vmatpush1.bf16.msra.mxu0 0
        %618 = vmatprep.subr.bf16.mxu0 0
        %619 = vmatpush1.bf16.msra.mxu0 0
        %620 = vmatprep.subr.bf16.mxu0 0
        %621 = vmatpush1.bf16.msra.mxu0 0
        %622 = vmatprep.subr.bf16.mxu0 0
        %623 = vmatpush1.bf16.msra.mxu0 0
        %624 = vmatprep.mubr.bf16.mxu0 0
        %625 = vmatmul.mubr.bf16.gmra.mrb[0].mxu0 %v510
        %v626 = vpop.f32.mrb[0].mxu0
        %v627 = vadd.f32 %v440, %v626
        %v628 = vpop.f32.mrb[0].mxu0
        %v629 = vpop.f32.mrb[0].mxu0
        %v630 = vadd.f32 %v440, %v629
        %v631 = vpop.f32.mrb[0].mxu0
        %632 = vmatprep.mubr.bf16.mxu0 0
        %633 = vmatmul.mubr.bf16.gmra.mrb[0].mxu0 %v511
        %v634 = vpop.f32.mrb[0].mxu0
        %v635 = vadd.f32 %v440, %v634
        %v636 = vpop.f32.mrb[0].mxu0
        %v637 = vpop.f32.mrb[0].mxu0
        %v638 = vadd.f32 %v440, %v637
        %v639 = vpop.f32.mrb[0].mxu0
        %640 = vmatprep.mubr.bf16.mxu0 0
        %641 = vmatmul.mubr.bf16.gmra.mrb[0].mxu0 %v512
        %v642 = vpop.f32.mrb[0].mxu0
        %v643 = vadd.f32 %v440, %v642
        %v644 = vpop.f32.mrb[0].mxu0
        %v645 = vpop.f32.mrb[0].mxu0
        %v646 = vadd.f32 %v440, %v645
        %v647 = vpop.f32.mrb[0].mxu0
        %648 = vmatprep.mubr.bf16.mxu0 0
        %649 = vmatmul.mubr.bf16.gmra.mrb[0].mxu0 %v513
        %v650 = vpop.f32.mrb[0].mxu0
        %v651 = vadd.f32 %v440, %v650
        %v652 = vpop.f32.mrb[0].mxu0
        %v653 = vpop.f32.mrb[0].mxu0
        %v654 = vadd.f32 %v440, %v653
        %v655 = vpop.f32.mrb[0].mxu0
        %656 = vmatprep.mubr.bf16.mxu0 0
        %657 = vmatmul.mubr.bf16.gmra.mrb[0].mxu0 %v514
        %v658 = vpop.f32.mrb[0].mxu0
        %v659 = vadd.f32 %v440, %v658
        %v660 = vpop.f32.mrb[0].mxu0
        %v661 = vpop.f32.mrb[0].mxu0
        %v662 = vadd.f32 %v440, %v661
        %v663 = vpop.f32.mrb[0].mxu0
        %664 = vmatprep.mubr.bf16.mxu0 0
        %665 = vmatmul.mubr.bf16.gmra.mrb[0].mxu0 %v515
        %v666 = vpop.f32.mrb[0].mxu0
        %v667 = vadd.f32 %v440, %v666
        %v668 = vpop.f32.mrb[0].mxu0
        %v669 = vpop.f32.mrb[0].mxu0
        %v670 = vadd.f32 %v440, %v669
        %v671 = vpop.f32.mrb[0].mxu0
        %672 = vmatprep.mubr.bf16.mxu0 0
        %673 = vmatmul.mubr.bf16.gmra.mrb[0].mxu0 %v516
        %v674 = vpop.f32.mrb[0].mxu0
        %v675 = vadd.f32 %v440, %v674
        %v676 = vpop.f32.mrb[0].mxu0
        %v677 = vpop.f32.mrb[0].mxu0
        %v678 = vadd.f32 %v440, %v677
        %v679 = vpop.f32.mrb[0].mxu0
        %680 = vmatprep.mubr.bf16.mxu0 0
        %681 = vmatmul.mubr.bf16.gmra.mrb[0].mxu0 %v517
        %v682 = vpop.f32.mrb[0].mxu0
        %v683 = vadd.f32 %v440, %v682
        %v684 = vpop.f32.mrb[0].mxu0
        %v685 = vpop.f32.mrb[0].mxu0
        %v686 = vadd.f32 %v440, %v685
        %v687 = vpop.f32.mrb[0].mxu0
        %688 = vmatprep.mubr.bf16.mxu0 0
        %689 = vmatmul.mubr.bf16.gmra.mrb[0].mxu0 %v518
        %v690 = vpop.f32.mrb[0].mxu0
        %v691 = vadd.f32 %v440, %v690
        %v692 = vpop.f32.mrb[0].mxu0
        %v693 = vpop.f32.mrb[0].mxu0
        %v694 = vadd.f32 %v440, %v693
        %v695 = vpop.f32.mrb[0].mxu0
        %696 = vmatprep.mubr.bf16.mxu0 0
        %697 = vmatmul.mubr.bf16.gmra.mrb[0].mxu0 %v519
        %v698 = vpop.f32.mrb[0].mxu0
        %v699 = vadd.f32 %v440, %v698
        %v700 = vpop.f32.mrb[0].mxu0
        %v701 = vpop.f32.mrb[0].mxu0
        %v702 = vadd.f32 %v440, %v701
        %v703 = vpop.f32.mrb[0].mxu0
        %704 = vmatprep.mubr.bf16.mxu0 0
        %705 = vmatmul.mubr.bf16.gmra.mrb[0].mxu0 %v520
        %v706 = vpop.f32.mrb[0].mxu0
        %v707 = vadd.f32 %v440, %v706
        %v708 = vpop.f32.mrb[0].mxu0
        %v709 = vpop.f32.mrb[0].mxu0
        %v710 = vadd.f32 %v440, %v709
        %v711 = vpop.f32.mrb[0].mxu0
        %712 = vmatprep.mubr.bf16.mxu0 0
        %713 = vmatmul.mubr.bf16.gmra.mrb[0].mxu0 %v521
        %v714 = vpop.f32.mrb[0].mxu0
        %v715 = vadd.f32 %v440, %v714
        %v716 = vpop.f32.mrb[0].mxu0
        %v717 = vpop.f32.mrb[0].mxu0
        %v718 = vadd.f32 %v440, %v717
        %v719 = vpop.f32.mrb[0].mxu0
        %720 = vmatprep.mubr.bf16.mxu0 0
        %721 = vmatmul.mubr.bf16.gmra.mrb[0].mxu0 %v522
        %v722 = vpop.f32.mrb[0].mxu0
        %v723 = vadd.f32 %v440, %v722
        %v724 = vpop.f32.mrb[0].mxu0
        %v725 = vpop.f32.mrb[0].mxu0
        %v726 = vadd.f32 %v440, %v725
        %v727 = vpop.f32.mrb[0].mxu0
        %728 = vmatprep.mubr.bf16.mxu0 0
        %729 = vmatmul.mubr.bf16.gmra.mrb[0].mxu0 %v523
        %v730 = vpop.f32.mrb[0].mxu0
        %v731 = vadd.f32 %v440, %v730
        %v732 = vpop.f32.mrb[0].mxu0
        %v733 = vpop.f32.mrb[0].mxu0
        %v734 = vadd.f32 %v440, %v733
        %v735 = vpop.f32.mrb[0].mxu0
        %736 = vmatprep.mubr.bf16.mxu0 0
        %737 = vmatmul.mubr.bf16.gmra.mrb[0].mxu0 %v524
        %v738 = vpop.f32.mrb[0].mxu0
        %v739 = vadd.f32 %v440, %v738
        %v740 = vpop.f32.mrb[0].mxu0
        %v741 = vpop.f32.mrb[0].mxu0
        %v742 = vadd.f32 %v440, %v741
        %v743 = vpop.f32.mrb[0].mxu0
        %744 = vmatprep.mubr.bf16.mxu0 0
        %745 = vmatmul.mubr.bf16.gmra.mrb[0].mxu0 %v525
        %v746 = vpop.f32.mrb[0].mxu0
        %v747 = vadd.f32 %v440, %v746
        %v748 = vpop.f32.mrb[0].mxu0
        %v749 = vpop.f32.mrb[0].mxu0
        %v750 = vadd.f32 %v440, %v749
        %v751 = vpop.f32.mrb[0].mxu0
        %752 = vmatprep.mubr.bf16.mxu0 0
        %753 = vmatmul.mubr.bf16.gmra.mrb[0].mxu0 %v526
        %v754 = vpop.f32.mrb[0].mxu0
        %v755 = vadd.f32 %v440, %v754
        %v756 = vpop.f32.mrb[0].mxu0
        %v757 = vpop.f32.mrb[0].mxu0
        %v758 = vadd.f32 %v440, %v757
        %v759 = vpop.f32.mrb[0].mxu0
        %760 = vdwg.mxu0
        %v761 = vmax.f32 %v627, 0.0
        %v762 = vmax.f32 %v630, 0.0
        %v763 = vmax.f32 %v635, 0.0
        %v764 = vmax.f32 %v638, 0.0
        %v765 = vmax.f32 %v643, 0.0
        %v766 = vmax.f32 %v646, 0.0
        %v767 = vmax.f32 %v651, 0.0
        %v768 = vmax.f32 %v654, 0.0
        %v769 = vmax.f32 %v659, 0.0
        %v770 = vmax.f32 %v662, 0.0
        %v771 = vmax.f32 %v667, 0.0
        %v772 = vmax.f32 %v670, 0.0
        %v773 = vmax.f32 %v675, 0.0
        %v774 = vmax.f32 %v678, 0.0
        %v775 = vmax.f32 %v683, 0.0
        %v776 = vmax.f32 %v686, 0.0
        %v777 = vmax.f32 %v691, 0.0
        %v778 = vmax.f32 %v694, 0.0
        %v779 = vmax.f32 %v699, 0.0
        %v780 = vmax.f32 %v702, 0.0
        %v781 = vmax.f32 %v707, 0.0
        %v782 = vmax.f32 %v710, 0.0
        %v783 = vmax.f32 %v715, 0.0
        %v784 = vmax.f32 %v718, 0.0
        %v785 = vmax.f32 %v723, 0.0
        %v786 = vmax.f32 %v726, 0.0
        %v787 = vmax.f32 %v731, 0.0
        %v788 = vmax.f32 %v734, 0.0
        %v789 = vmax.f32 %v739, 0.0
        %v790 = vmax.f32 %v742, 0.0
        %v791 = vmax.f32 %v747, 0.0
        %v792 = vmax.f32 %v750, 0.0
        %v793 = vmax.f32 %v755, 0.0
        %v794 = vmax.f32 %v758, 0.0
        %v795 = vpack.c.bf16 %v762, %v761
        %v796 = vpack.c.bf16 %v764, %v763
        %v797 = vpack.c.bf16 %v766, %v765
        %v798 = vpack.c.bf16 %v768, %v767
        %v799 = vpack.c.bf16 %v770, %v769
        %v800 = vpack.c.bf16 %v772, %v771
        %v801 = vpack.c.bf16 %v774, %v773
        %v802 = vpack.c.bf16 %v776, %v775
        %v803 = vpack.c.bf16 %v778, %v777
        %v804 = vpack.c.bf16 %v780, %v779
        %v805 = vpack.c.bf16 %v782, %v781
        %v806 = vpack.c.bf16 %v784, %v783
        %v807 = vpack.c.bf16 %v786, %v785
        %v808 = vpack.c.bf16 %v788, %v787
        %v809 = vpack.c.bf16 %v790, %v789
        %v810 = vpack.c.bf16 %v792, %v791
        %v811 = vpack.c.bf16 %v794, %v793
        %v812 = vld [vmem:[%s4] sm:$0xf]
        %v813 = vld [vmem:[%s4 + $0x4] sm:$0xf]
        %v814 = vld [vmem:[%s4 + $0x8] sm:$0xf]
        %v815 = vld [vmem:[%s4 + $0xc] sm:$0xf]
        %v816 = vld [vmem:[%s4 + $0x10] sm:$0xf]
        %v817 = vld [vmem:[%s4 + $0x14] sm:$0xf]
        %v818 = vld [vmem:[%s4 + $0x18] sm:$0xf]
        %v819 = vld [vmem:[%s4 + $0x1c] sm:$0xf]
        %v820 = vld [vmem:[%s4 + $0x20] sm:$0xf]
        %v821 = vld [vmem:[%s4 + $0x24] sm:$0xf]
        %v822 = vld [vmem:[%s4 + $0x28] sm:$0xf]
        %v823 = vld [vmem:[%s4 + $0x2c] sm:$0xf]
        %v824 = vld [vmem:[%s4 + $0x30] sm:$0xf]
        %v825 = vld [vmem:[%s4 + $0x34] sm:$0xf]
        %v826 = vld [vmem:[%s4 + $0x38] sm:$0xf]
        %v827 = vld [vmem:[%s4 + $0x3c] sm:$0xf]
        %s828 = sld [smem:[#allocation2]]
        %v829 = vstv %s828
        %v846 = vunpack.c.l.b16 %v812
        %v847 = vunpack.c.l.b16 %v813
        %v848 = vunpack.c.l.b16 %v814
        %v849 = vunpack.c.l.b16 %v815
        %v850 = vunpack.c.l.b16 %v816
        %v851 = vunpack.c.l.b16 %v817
        %v852 = vunpack.c.l.b16 %v818
        %v853 = vunpack.c.l.b16 %v819
        %v854 = vunpack.c.l.b16 %v820
        %v855 = vunpack.c.l.b16 %v821
        %v856 = vunpack.c.l.b16 %v822
        %v857 = vunpack.c.l.b16 %v823
        %v858 = vunpack.c.l.b16 %v824
        %v859 = vunpack.c.l.b16 %v825
        %v860 = vunpack.c.l.b16 %v826
        %v861 = vunpack.c.l.b16 %v827
        %v862 = vpack.c.b16 %v847, %v846
        %v863 = vpack.c.b16 %v849, %v848
        %v864 = vpack.c.b16 %v851, %v850
        %v865 = vpack.c.b16 %v853, %v852
        %v866 = vpack.c.b16 %v855, %v854
        %v867 = vpack.c.b16 %v857, %v856
        %v868 = vpack.c.b16 %v859, %v858
        %v869 = vpack.c.b16 %v861, %v860
        %878 = vmatprep.subr.bf16.mxu0 0
        %879 = vmatpush1.bf16.msra.mxu0 %v862
        %880 = vmatprep.subr.bf16.mxu0 0
        %881 = vmatpush1.bf16.msra.mxu0 %v863
        %882 = vmatprep.subr.bf16.mxu0 0
        %883 = vmatpush1.bf16.msra.mxu0 %v864
        %884 = vmatprep.subr.bf16.mxu0 0
        %885 = vmatpush1.bf16.msra.mxu0 %v865
        %886 = vmatprep.subr.bf16.mxu0 0
        %887 = vmatpush1.bf16.msra.mxu0 %v866
        %888 = vmatprep.subr.bf16.mxu0 0
        %889 = vmatpush1.bf16.msra.mxu0 %v867
        %890 = vmatprep.subr.bf16.mxu0 0
        %891 = vmatpush1.bf16.msra.mxu0 %v868
        %892 = vmatprep.subr.bf16.mxu0 0
        %893 = vmatpush1.bf16.msra.mxu0 %v869
        %894 = vmatprep.subr.bf16.mxu0 0
        %895 = vmatpush1.bf16.msra.mxu0 0
        %896 = vmatprep.subr.bf16.mxu0 0
        %897 = vmatpush1.bf16.msra.mxu0 0
        %898 = vmatprep.subr.bf16.mxu0 0
        %899 = vmatpush1.bf16.msra.mxu0 0
        %900 = vmatprep.subr.bf16.mxu0 0
        %901 = vmatpush1.bf16.msra.mxu0 0
        %902 = vmatprep.subr.bf16.mxu0 0
        %903 = vmatpush1.bf16.msra.mxu0 0
        %904 = vmatprep.subr.bf16.mxu0 0
        %905 = vmatpush1.bf16.msra.mxu0 0
        %906 = vmatprep.subr.bf16.mxu0 0
        %907 = vmatpush1.bf16.msra.mxu0 0
        %908 = vmatprep.subr.bf16.mxu0 0
        %909 = vmatpush1.bf16.msra.mxu0 0
        %910 = vmatprep.mubr.bf16.mxu0 0
        %911 = vmatmul.mubr.bf16.gmra.mrb[0].mxu0 %v795
        %v912 = vpop.f32.mrb[0].mxu0
        %v913 = vadd.f32 %v829, %v912
        %v914 = vpop.f32.mrb[0].mxu0
        %v915 = vpop.f32.mrb[0].mxu0
        %v916 = vadd.f32 %v829, %v915
        %v917 = vpop.f32.mrb[0].mxu0
        %918 = vmatprep.mubr.bf16.mxu0 0
        %919 = vmatmul.mubr.bf16.gmra.mrb[0].mxu0 %v796
        %v920 = vpop.f32.mrb[0].mxu0
        %v921 = vadd.f32 %v829, %v920
        %v922 = vpop.f32.mrb[0].mxu0
        %v923 = vpop.f32.mrb[0].mxu0
        %v924 = vadd.f32 %v829, %v923
        %v925 = vpop.f32.mrb[0].mxu0
        %926 = vmatprep.mubr.bf16.mxu0 0
        %927 = vmatmul.mubr.bf16.gmra.mrb[0].mxu0 %v797
        %v928 = vpop.f32.mrb[0].mxu0
        %v929 = vadd.f32 %v829, %v928
        %v930 = vpop.f32.mrb[0].mxu0
        %v931 = vpop.f32.mrb[0].mxu0
        %v932 = vadd.f32 %v829, %v931
        %v933 = vpop.f32.mrb[0].mxu0
        %934 = vmatprep.mubr.bf16.mxu0 0
        %935 = vmatmul.mubr.bf16.gmra.mrb[0].mxu0 %v798
        %v936 = vpop.f32.mrb[0].mxu0
        %v937 = vadd.f32 %v829, %v936
        %v938 = vpop.f32.mrb[0].mxu0
        %v939 = vpop.f32.mrb[0].mxu0
        %v940 = vadd.f32 %v829, %v939
        %v941 = vpop.f32.mrb[0].mxu0
        %942 = vmatprep.mubr.bf16.mxu0 0
        %943 = vmatmul.mubr.bf16.gmra.mrb[0].mxu0 %v799
        %v944 = vpop.f32.mrb[0].mxu0
        %v945 = vadd.f32 %v829, %v944
        %v946 = vpop.f32.mrb[0].mxu0
        %v947 = vpop.f32.mrb[0].mxu0
        %v948 = vadd.f32 %v829, %v947
        %v949 = vpop.f32.mrb[0].mxu0
        %950 = vmatprep.mubr.bf16.mxu0 0
        %951 = vmatmul.mubr.bf16.gmra.mrb[0].mxu0 %v800
        %v952 = vpop.f32.mrb[0].mxu0
        %v953 = vadd.f32 %v829, %v952
        %v954 = vpop.f32.mrb[0].mxu0
        %v955 = vpop.f32.mrb[0].mxu0
        %v956 = vadd.f32 %v829, %v955
        %v957 = vpop.f32.mrb[0].mxu0
        %958 = vmatprep.mubr.bf16.mxu0 0
        %959 = vmatmul.mubr.bf16.gmra.mrb[0].mxu0 %v801
        %v960 = vpop.f32.mrb[0].mxu0
        %v961 = vadd.f32 %v829, %v960
        %v962 = vpop.f32.mrb[0].mxu0
        %v963 = vpop.f32.mrb[0].mxu0
        %v964 = vadd.f32 %v829, %v963
        %v965 = vpop.f32.mrb[0].mxu0
        %966 = vmatprep.mubr.bf16.mxu0 0
        %967 = vmatmul.mubr.bf16.gmra.mrb[0].mxu0 %v802
        %v968 = vpop.f32.mrb[0].mxu0
        %v969 = vadd.f32 %v829, %v968
        %v970 = vpop.f32.mrb[0].mxu0
        %v971 = vpop.f32.mrb[0].mxu0
        %v972 = vadd.f32 %v829, %v971
        %v973 = vpop.f32.mrb[0].mxu0
        %974 = vmatprep.mubr.bf16.mxu0 0
        %975 = vmatmul.mubr.bf16.gmra.mrb[0].mxu0 %v803
        %v976 = vpop.f32.mrb[0].mxu0
        %v977 = vadd.f32 %v829, %v976
        %v978 = vpop.f32.mrb[0].mxu0
        %v979 = vpop.f32.mrb[0].mxu0
        %v980 = vadd.f32 %v829, %v979
        %v981 = vpop.f32.mrb[0].mxu0
        %982 = vmatprep.mubr.bf16.mxu0 0
        %983 = vmatmul.mubr.bf16.gmra.mrb[0].mxu0 %v804
        %v984 = vpop.f32.mrb[0].mxu0
        %v985 = vadd.f32 %v829, %v984
        %v986 = vpop.f32.mrb[0].mxu0
        %v987 = vpop.f32.mrb[0].mxu0
        %v988 = vadd.f32 %v829, %v987
        %v989 = vpop.f32.mrb[0].mxu0
        %990 = vmatprep.mubr.bf16.mxu0 0
        %991 = vmatmul.mubr.bf16.gmra.mrb[0].mxu0 %v805
        %v992 = vpop.f32.mrb[0].mxu0
        %v993 = vadd.f32 %v829, %v992
        %v994 = vpop.f32.mrb[0].mxu0
        %v995 = vpop.f32.mrb[0].mxu0
        %v996 = vadd.f32 %v829, %v995
        %v997 = vpop.f32.mrb[0].mxu0
        %998 = vmatprep.mubr.bf16.mxu0 0
        %999 = vmatmul.mubr.bf16.gmra.mrb[0].mxu0 %v806
        %v1000 = vpop.f32.mrb[0].mxu0
        %v1001 = vadd.f32 %v829, %v1000
        %v1002 = vpop.f32.mrb[0].mxu0
        %v1003 = vpop.f32.mrb[0].mxu0
        %v1004 = vadd.f32 %v829, %v1003
        %v1005 = vpop.f32.mrb[0].mxu0
        %1006 = vmatprep.mubr.bf16.mxu0 0
        %1007 = vmatmul.mubr.bf16.gmra.mrb[0].mxu0 %v807
        %v1008 = vpop.f32.mrb[0].mxu0
        %v1009 = vadd.f32 %v829, %v1008
        %v1010 = vpop.f32.mrb[0].mxu0
        %v1011 = vpop.f32.mrb[0].mxu0
        %v1012 = vadd.f32 %v829, %v1011
        %v1013 = vpop.f32.mrb[0].mxu0
        %1014 = vmatprep.mubr.bf16.mxu0 0
        %1015 = vmatmul.mubr.bf16.gmra.mrb[0].mxu0 %v808
        %v1016 = vpop.f32.mrb[0].mxu0
        %v1017 = vadd.f32 %v829, %v1016
        %v1018 = vpop.f32.mrb[0].mxu0
        %v1019 = vpop.f32.mrb[0].mxu0
        %v1020 = vadd.f32 %v829, %v1019
        %v1021 = vpop.f32.mrb[0].mxu0
        %1022 = vmatprep.mubr.bf16.mxu0 0
        %1023 = vmatmul.mubr.bf16.gmra.mrb[0].mxu0 %v809
        %v1024 = vpop.f32.mrb[0].mxu0
        %v1025 = vadd.f32 %v829, %v1024
        %v1026 = vpop.f32.mrb[0].mxu0
        %v1027 = vpop.f32.mrb[0].mxu0
        %v1028 = vadd.f32 %v829, %v1027
        %v1029 = vpop.f32.mrb[0].mxu0
        %1030 = vmatprep.mubr.bf16.mxu0 0
        %1031 = vmatmul.mubr.bf16.gmra.mrb[0].mxu0 %v810
        %v1032 = vpop.f32.mrb[0].mxu0
        %v1033 = vadd.f32 %v829, %v1032
        %v1034 = vpop.f32.mrb[0].mxu0
        %v1035 = vpop.f32.mrb[0].mxu0
        %v1036 = vadd.f32 %v829, %v1035
        %v1037 = vpop.f32.mrb[0].mxu0
        %1038 = vmatprep.mubr.bf16.mxu0 0
        %1039 = vmatmul.mubr.bf16.gmra.mrb[0].mxu0 %v811
        %v1040 = vpop.f32.mrb[0].mxu0
        %v1041 = vadd.f32 %v829, %v1040
        %v1042 = vpop.f32.mrb[0].mxu0
        %v1043 = vpop.f32.mrb[0].mxu0
        %v1044 = vadd.f32 %v829, %v1043
        %v1045 = vpop.f32.mrb[0].mxu0
        %1046 = vdwg.mxu0
        %v1047 = vmax.f32 %v913, 0.0
        %v1048 = vmax.f32 %v916, 0.0
        %v1049 = vmax.f32 %v921, 0.0
        %v1050 = vmax.f32 %v924, 0.0
        %v1051 = vmax.f32 %v929, 0.0
        %v1052 = vmax.f32 %v932, 0.0
        %v1053 = vmax.f32 %v937, 0.0
        %v1054 = vmax.f32 %v940, 0.0
        %v1055 = vmax.f32 %v945, 0.0
        %v1056 = vmax.f32 %v948, 0.0
        %v1057 = vmax.f32 %v953, 0.0
        %v1058 = vmax.f32 %v956, 0.0
        %v1059 = vmax.f32 %v961, 0.0
        %v1060 = vmax.f32 %v964, 0.0
        %v1061 = vmax.f32 %v969, 0.0
        %v1062 = vmax.f32 %v972, 0.0
        %v1063 = vmax.f32 %v977, 0.0
        %v1064 = vmax.f32 %v980, 0.0
        %v1065 = vmax.f32 %v985, 0.0
        %v1066 = vmax.f32 %v988, 0.0
        %v1067 = vmax.f32 %v993, 0.0
        %v1068 = vmax.f32 %v996, 0.0
        %v1069 = vmax.f32 %v1001, 0.0
        %v1070 = vmax.f32 %v1004, 0.0
        %v1071 = vmax.f32 %v1009, 0.0
        %v1072 = vmax.f32 %v1012, 0.0
        %v1073 = vmax.f32 %v1017, 0.0
        %v1074 = vmax.f32 %v1020, 0.0
        %v1075 = vmax.f32 %v1025, 0.0
        %v1076 = vmax.f32 %v1028, 0.0
        %v1077 = vmax.f32 %v1033, 0.0
        %v1078 = vmax.f32 %v1036, 0.0
        %v1079 = vmax.f32 %v1041, 0.0
        %v1080 = vmax.f32 %v1044, 0.0
        %v1081 = vsub.f32 0.0, %v1047
        %v1082 = vsub.f32 0.0, %v1048
        %v1083 = vsub.f32 0.0, %v1049
        %v1084 = vsub.f32 0.0, %v1050
        %v1085 = vsub.f32 0.0, %v1051
        %v1086 = vsub.f32 0.0, %v1052
        %v1087 = vsub.f32 0.0, %v1053
        %v1088 = vsub.f32 0.0, %v1054
        %v1089 = vsub.f32 0.0, %v1055
        %v1090 = vsub.f32 0.0, %v1056
        %v1091 = vsub.f32 0.0, %v1057
        %v1092 = vsub.f32 0.0, %v1058
        %v1093 = vsub.f32 0.0, %v1059
        %v1094 = vsub.f32 0.0, %v1060
        %v1095 = vsub.f32 0.0, %v1061
        %v1096 = vsub.f32 0.0, %v1062
        %v1097 = vsub.f32 0.0, %v1063
        %v1098 = vsub.f32 0.0, %v1064
        %v1099 = vsub.f32 0.0, %v1065
        %v1100 = vsub.f32 0.0, %v1066
        %v1101 = vsub.f32 0.0, %v1067
        %v1102 = vsub.f32 0.0, %v1068
        %v1103 = vsub.f32 0.0, %v1069
        %v1104 = vsub.f32 0.0, %v1070
        %v1105 = vsub.f32 0.0, %v1071
        %v1106 = vsub.f32 0.0, %v1072
        %v1107 = vsub.f32 0.0, %v1073
        %v1108 = vsub.f32 0.0, %v1074
        %v1109 = vsub.f32 0.0, %v1075
        %v1110 = vsub.f32 0.0, %v1076
        %v1111 = vsub.f32 0.0, %v1077
        %v1112 = vsub.f32 0.0, %v1078
        %v1113 = vsub.f32 0.0, %v1079
        %v1114 = vsub.f32 0.0, %v1080
        %v1115 = vmul.f32 %v1081, 1.442695
        %v1116 = vpow.pop %v1115
        %v1117 = vmul.f32 %v1082, 1.442695
        %v1118 = vpow.pop %v1117
        %v1119 = vmul.f32 %v1083, 1.442695
        %v1120 = vpow.pop %v1119
        %v1121 = vmul.f32 %v1084, 1.442695
        %v1122 = vpow.pop %v1121
        %v1123 = vmul.f32 %v1085, 1.442695
        %v1124 = vpow.pop %v1123
        %v1125 = vmul.f32 %v1086, 1.442695
        %v1126 = vpow.pop %v1125
        %v1127 = vmul.f32 %v1087, 1.442695
        %v1128 = vpow.pop %v1127
        %v1129 = vmul.f32 %v1088, 1.442695
        %v1130 = vpow.pop %v1129
        %v1131 = vmul.f32 %v1089, 1.442695
        %v1132 = vpow.pop %v1131
        %v1133 = vmul.f32 %v1090, 1.442695
        %v1134 = vpow.pop %v1133
        %v1135 = vmul.f32 %v1091, 1.442695
        %v1136 = vpow.pop %v1135
        %v1137 = vmul.f32 %v1092, 1.442695
        %v1138 = vpow.pop %v1137
        %v1139 = vmul.f32 %v1093, 1.442695
        %v1140 = vpow.pop %v1139
        %v1141 = vmul.f32 %v1094, 1.442695
        %v1142 = vpow.pop %v1141
        %v1143 = vmul.f32 %v1095, 1.442695
        %v1144 = vpow.pop %v1143
        %v1145 = vmul.f32 %v1096, 1.442695
        %v1146 = vpow.pop %v1145
        %v1147 = vmul.f32 %v1097, 1.442695
        %v1148 = vpow.pop %v1147
        %v1149 = vmul.f32 %v1098, 1.442695
        %v1150 = vpow.pop %v1149
        %v1151 = vmul.f32 %v1099, 1.442695
        %v1152 = vpow.pop %v1151
        %v1153 = vmul.f32 %v1100, 1.442695
        %v1154 = vpow.pop %v1153
        %v1155 = vmul.f32 %v1101, 1.442695
        %v1156 = vpow.pop %v1155
        %v1157 = vmul.f32 %v1102, 1.442695
        %v1158 = vpow.pop %v1157
        %v1159 = vmul.f32 %v1103, 1.442695
        %v1160 = vpow.pop %v1159
        %v1161 = vmul.f32 %v1104, 1.442695
        %v1162 = vpow.pop %v1161
        %v1163 = vmul.f32 %v1105, 1.442695
        %v1164 = vpow.pop %v1163
        %v1165 = vmul.f32 %v1106, 1.442695
        %v1166 = vpow.pop %v1165
        %v1167 = vmul.f32 %v1107, 1.442695
        %v1168 = vpow.pop %v1167
        %v1169 = vmul.f32 %v1108, 1.442695
        %v1170 = vpow.pop %v1169
        %v1171 = vmul.f32 %v1109, 1.442695
        %v1172 = vpow.pop %v1171
        %v1173 = vmul.f32 %v1110, 1.442695
        %v1174 = vpow.pop %v1173
        %v1175 = vmul.f32 %v1111, 1.442695
        %v1176 = vpow.pop %v1175
        %v1177 = vmul.f32 %v1112, 1.442695
        %v1178 = vpow.pop %v1177
        %v1179 = vmul.f32 %v1113, 1.442695
        %v1180 = vpow.pop %v1179
        %v1181 = vmul.f32 %v1114, 1.442695
        %v1182 = vpow.pop %v1181
        %v1183 = vadd.f32 %v1116, 1.0
        %v1184 = vadd.f32 %v1118, 1.0
        %v1185 = vadd.f32 %v1120, 1.0
        %v1186 = vadd.f32 %v1122, 1.0
        %v1187 = vadd.f32 %v1124, 1.0
        %v1188 = vadd.f32 %v1126, 1.0
        %v1189 = vadd.f32 %v1128, 1.0
        %v1190 = vadd.f32 %v1130, 1.0
        %v1191 = vadd.f32 %v1132, 1.0
        %v1192 = vadd.f32 %v1134, 1.0
        %v1193 = vadd.f32 %v1136, 1.0
        %v1194 = vadd.f32 %v1138, 1.0
        %v1195 = vadd.f32 %v1140, 1.0
        %v1196 = vadd.f32 %v1142, 1.0
        %v1197 = vadd.f32 %v1144, 1.0
        %v1198 = vadd.f32 %v1146, 1.0
        %v1199 = vadd.f32 %v1148, 1.0
        %v1200 = vadd.f32 %v1150, 1.0
        %v1201 = vadd.f32 %v1152, 1.0
        %v1202 = vadd.f32 %v1154, 1.0
        %v1203 = vadd.f32 %v1156, 1.0
        %v1204 = vadd.f32 %v1158, 1.0
        %v1205 = vadd.f32 %v1160, 1.0
        %v1206 = vadd.f32 %v1162, 1.0
        %v1207 = vadd.f32 %v1164, 1.0
        %v1208 = vadd.f32 %v1166, 1.0
        %v1209 = vadd.f32 %v1168, 1.0
        %v1210 = vadd.f32 %v1170, 1.0
        %v1211 = vadd.f32 %v1172, 1.0
        %v1212 = vadd.f32 %v1174, 1.0
        %v1213 = vadd.f32 %v1176, 1.0
        %v1214 = vadd.f32 %v1178, 1.0
        %v1215 = vadd.f32 %v1180, 1.0
        %v1216 = vadd.f32 %v1182, 1.0
        %v1217 = vrcp.pop %v1183
        %v1218 = vrcp.pop %v1184
        %v1219 = vrcp.pop %v1185
        %v1220 = vrcp.pop %v1186
        %v1221 = vrcp.pop %v1187
        %v1222 = vrcp.pop %v1188
        %v1223 = vrcp.pop %v1189
        %v1224 = vrcp.pop %v1190
        %v1225 = vrcp.pop %v1191
        %v1226 = vrcp.pop %v1192
        %v1227 = vrcp.pop %v1193
        %v1228 = vrcp.pop %v1194
        %v1229 = vrcp.pop %v1195
        %v1230 = vrcp.pop %v1196
        %v1231 = vrcp.pop %v1197
        %v1232 = vrcp.pop %v1198
        %v1233 = vrcp.pop %v1199
        %v1234 = vrcp.pop %v1200
        %v1235 = vrcp.pop %v1201
        %v1236 = vrcp.pop %v1202
        %v1237 = vrcp.pop %v1203
        %v1238 = vrcp.pop %v1204
        %v1239 = vrcp.pop %v1205
        %v1240 = vrcp.pop %v1206
        %v1241 = vrcp.pop %v1207
        %v1242 = vrcp.pop %v1208
        %v1243 = vrcp.pop %v1209
        %v1244 = vrcp.pop %v1210
        %v1245 = vrcp.pop %v1211
        %v1246 = vrcp.pop %v1212
        %v1247 = vrcp.pop %v1213
        %v1248 = vrcp.pop %v1214
        %v1249 = vrcp.pop %v1215
        %v1250 = vrcp.pop %v1216
        %v1251 = vunpack.c.l.bf16 %v317
        %v1252 = vunpack.c.l.bf16 %v318
        %v1253 = vunpack.c.l.bf16 %v319
        %v1254 = vunpack.c.l.bf16 %v320
        %v1255 = vunpack.c.l.bf16 %v321
        %v1256 = vunpack.c.l.bf16 %v322
        %v1257 = vunpack.c.l.bf16 %v323
        %v1258 = vunpack.c.l.bf16 %v324
        %v1259 = vunpack.c.l.bf16 %v325
        %v1260 = vunpack.c.l.bf16 %v326
        %v1261 = vunpack.c.l.bf16 %v327
        %v1262 = vunpack.c.l.bf16 %v328
        %v1263 = vunpack.c.l.bf16 %v329
        %v1264 = vunpack.c.l.bf16 %v330
        %v1265 = vunpack.c.l.bf16 %v331
        %v1266 = vunpack.c.l.bf16 %v332
        %v1267 = vunpack.c.l.bf16 %v333
        %v1268 = vunpack.c.l.bf16 %v334
        %v1269 = vunpack.c.l.bf16 %v335
        %v1270 = vunpack.c.l.bf16 %v336
        %v1271 = vunpack.c.l.bf16 %v337
        %v1272 = vunpack.c.l.bf16 %v338
        %v1273 = vunpack.c.l.bf16 %v339
        %v1274 = vunpack.c.l.bf16 %v340
        %v1275 = vunpack.c.l.bf16 %v341
        %v1276 = vunpack.c.l.bf16 %v342
        %v1277 = vunpack.c.l.bf16 %v343
        %v1278 = vunpack.c.l.bf16 %v344
        %v1279 = vunpack.c.l.bf16 %v345
        %v1280 = vunpack.c.l.bf16 %v346
        %v1281 = vunpack.c.l.bf16 %v347
        %v1282 = vunpack.c.l.bf16 %v348
        %v1283 = vunpack.c.l.bf16 %v349
        %v1284 = vunpack.c.l.bf16 %v350
        %v1285 = vmul.f32 %v1217, %v1251
        %v1286 = vmul.f32 %v1218, %v1252
        %v1287 = vmul.f32 %v1219, %v1253
        %v1288 = vmul.f32 %v1220, %v1254
        %v1289 = vmul.f32 %v1221, %v1255
        %v1290 = vmul.f32 %v1222, %v1256
        %v1291 = vmul.f32 %v1223, %v1257
        %v1292 = vmul.f32 %v1224, %v1258
        %v1293 = vmul.f32 %v1225, %v1259
        %v1294 = vmul.f32 %v1226, %v1260
        %v1295 = vmul.f32 %v1227, %v1261
        %v1296 = vmul.f32 %v1228, %v1262
        %v1297 = vmul.f32 %v1229, %v1263
        %v1298 = vmul.f32 %v1230, %v1264
        %v1299 = vmul.f32 %v1231, %v1265
        %v1300 = vmul.f32 %v1232, %v1266
        %v1301 = vmul.f32 %v1233, %v1267
        %v1302 = vmul.f32 %v1234, %v1268
        %v1303 = vmul.f32 %v1235, %v1269
        %v1304 = vmul.f32 %v1236, %v1270
        %v1305 = vmul.f32 %v1237, %v1271
        %v1306 = vmul.f32 %v1238, %v1272
        %v1307 = vmul.f32 %v1239, %v1273
        %v1308 = vmul.f32 %v1240, %v1274
        %v1309 = vmul.f32 %v1241, %v1275
        %v1310 = vmul.f32 %v1242, %v1276
        %v1311 = vmul.f32 %v1243, %v1277
        %v1312 = vmul.f32 %v1244, %v1278
        %v1313 = vmul.f32 %v1245, %v1279
        %v1314 = vmul.f32 %v1246, %v1280
        %v1315 = vmul.f32 %v1247, %v1281
        %v1316 = vmul.f32 %v1248, %v1282
        %v1317 = vmul.f32 %v1249, %v1283
        %v1318 = vmul.f32 %v1250, %v1284
        %v1319 = vpack.c.bf16 %v1286, %v1285
        %v1320 = vpack.c.bf16 %v1288, %v1287
        %v1321 = vpack.c.bf16 %v1290, %v1289
        %v1322 = vpack.c.bf16 %v1292, %v1291
        %v1323 = vpack.c.bf16 %v1294, %v1293
        %v1324 = vpack.c.bf16 %v1296, %v1295
        %v1325 = vpack.c.bf16 %v1298, %v1297
        %v1326 = vpack.c.bf16 %v1300, %v1299
        %v1327 = vpack.c.bf16 %v1302, %v1301
        %v1328 = vpack.c.bf16 %v1304, %v1303
        %v1329 = vpack.c.bf16 %v1306, %v1305
        %v1330 = vpack.c.bf16 %v1308, %v1307
        %v1331 = vpack.c.bf16 %v1310, %v1309
        %v1332 = vpack.c.bf16 %v1312, %v1311
        %v1333 = vpack.c.bf16 %v1314, %v1313
        %v1334 = vpack.c.bf16 %v1316, %v1315
        %v1335 = vpack.c.bf16 %v1318, %v1317
        %v1353 = vunpack.c.l.b16 %v1319
        %v1354 = vunpack.c.h.b16 %v1319
        %v1355 = vunpack.c.l.b16 %v1320
        %v1356 = vunpack.c.h.b16 %v1320
        %v1357 = vunpack.c.l.b16 %v1321
        %v1358 = vunpack.c.h.b16 %v1321
        %v1359 = vunpack.c.l.b16 %v1322
        %v1360 = vunpack.c.h.b16 %v1322
        %v1361 = vunpack.c.l.b16 %v1323
        %v1362 = vunpack.c.h.b16 %v1323
        %v1363 = vunpack.c.l.b16 %v1324
        %v1364 = vunpack.c.h.b16 %v1324
        %v1365 = vunpack.c.l.b16 %v1325
        %v1366 = vunpack.c.h.b16 %v1325
        %v1367 = vunpack.c.l.b16 %v1326
        %v1368 = vunpack.c.h.b16 %v1326
        %v1369 = vunpack.c.l.b16 %v1327
        %v1370 = vunpack.c.h.b16 %v1327
        %v1371 = vunpack.c.l.b16 %v1328
        %v1372 = vunpack.c.h.b16 %v1328
        %v1373 = vunpack.c.l.b16 %v1329
        %v1374 = vunpack.c.h.b16 %v1329
        %v1375 = vunpack.c.l.b16 %v1330
        %v1376 = vunpack.c.h.b16 %v1330
        %v1377 = vunpack.c.l.b16 %v1331
        %v1378 = vunpack.c.h.b16 %v1331
        %v1379 = vunpack.c.l.b16 %v1332
        %v1380 = vunpack.c.h.b16 %v1332
        %v1381 = vunpack.c.l.b16 %v1333
        %v1382 = vunpack.c.h.b16 %v1333
        %v1383 = vunpack.c.l.b16 %v1334
        %v1384 = vunpack.c.h.b16 %v1334
        %v1385 = vunpack.c.l.b16 %v1335
        %v1386 = vunpack.c.h.b16 %v1335
        %v1387 = vpack.c.b16 %v1353, %v1353
        %v1388 = vpack.c.b16 %v1354, %v1354
        %v1389 = vpack.c.b16 %v1355, %v1355
        %v1390 = vpack.c.b16 %v1356, %v1356
        %v1391 = vpack.c.b16 %v1357, %v1357
        %v1392 = vpack.c.b16 %v1358, %v1358
        %v1393 = vpack.c.b16 %v1359, %v1359
        %v1394 = vpack.c.b16 %v1360, %v1360
        %v1395 = vpack.c.b16 %v1361, %v1361
        %v1396 = vpack.c.b16 %v1362, %v1362
        %v1397 = vpack.c.b16 %v1363, %v1363
        %v1398 = vpack.c.b16 %v1364, %v1364
        %v1399 = vpack.c.b16 %v1365, %v1365
        %v1400 = vpack.c.b16 %v1366, %v1366
        %v1401 = vpack.c.b16 %v1367, %v1367
        %v1402 = vpack.c.b16 %v1368, %v1368
        %v1403 = vpack.c.b16 %v1369, %v1369
        %v1404 = vpack.c.b16 %v1370, %v1370
        %v1405 = vpack.c.b16 %v1371, %v1371
        %v1406 = vpack.c.b16 %v1372, %v1372
        %v1407 = vpack.c.b16 %v1373, %v1373
        %v1408 = vpack.c.b16 %v1374, %v1374
        %v1409 = vpack.c.b16 %v1375, %v1375
        %v1410 = vpack.c.b16 %v1376, %v1376
        %v1411 = vpack.c.b16 %v1377, %v1377
        %v1412 = vpack.c.b16 %v1378, %v1378
        %v1413 = vpack.c.b16 %v1379, %v1379
        %v1414 = vpack.c.b16 %v1380, %v1380
        %v1415 = vpack.c.b16 %v1381, %v1381
        %v1416 = vpack.c.b16 %v1382, %v1382
        %v1417 = vpack.c.b16 %v1383, %v1383
        %v1418 = vpack.c.b16 %v1384, %v1384
        %v1419 = vpack.c.b16 %v1385, %v1385
        %v1420 = vpack.c.b16 %v1386, %v1386
        %1455 = vst [vmem:[%s282] sm:$0xf] %v1387
        %1456 = vst [vmem:[%s282 + $0x4] sm:$0xf] %v1388
        %1457 = vst [vmem:[%s282 + $0x8] sm:$0xf] %v1389
        %1458 = vst [vmem:[%s282 + $0xc] sm:$0xf] %v1390
        %1459 = vst [vmem:[%s282 + $0x10] sm:$0xf] %v1391
        %1460 = vst [vmem:[%s282 + $0x14] sm:$0xf] %v1392
        %1461 = vst [vmem:[%s282 + $0x18] sm:$0xf] %v1393
        %1462 = vst [vmem:[%s282 + $0x1c] sm:$0xf] %v1394
        %1463 = vst [vmem:[%s282 + $0x20] sm:$0xf] %v1395
        %1464 = vst [vmem:[%s282 + $0x24] sm:$0xf] %v1396
        %1465 = vst [vmem:[%s282 + $0x28] sm:$0xf] %v1397
        %1466 = vst [vmem:[%s282 + $0x2c] sm:$0xf] %v1398
        %1467 = vst [vmem:[%s282 + $0x30] sm:$0xf] %v1399
        %1468 = vst [vmem:[%s282 + $0x34] sm:$0xf] %v1400
        %1469 = vst [vmem:[%s282 + $0x38] sm:$0xf] %v1401
        %1470 = vst [vmem:[%s282 + $0x3c] sm:$0xf] %v1402
        %1471 = vst [vmem:[%s282 + $0x40] sm:$0xf] %v1403
        %1472 = vst [vmem:[%s282 + $0x44] sm:$0xf] %v1404
        %1473 = vst [vmem:[%s282 + $0x48] sm:$0xf] %v1405
        %1474 = vst [vmem:[%s282 + $0x4c] sm:$0xf] %v1406
        %1475 = vst [vmem:[%s282 + $0x50] sm:$0xf] %v1407
        %1476 = vst [vmem:[%s282 + $0x54] sm:$0xf] %v1408
        %1477 = vst [vmem:[%s282 + $0x58] sm:$0xf] %v1409
        %1478 = vst [vmem:[%s282 + $0x5c] sm:$0xf] %v1410
        %1479 = vst [vmem:[%s282 + $0x60] sm:$0xf] %v1411
        %1480 = vst [vmem:[%s282 + $0x64] sm:$0xf] %v1412
        %1481 = vst [vmem:[%s282 + $0x68] sm:$0xf] %v1413
        %1482 = vst [vmem:[%s282 + $0x6c] sm:$0xf] %v1414
        %1483 = vst [vmem:[%s282 + $0x70] sm:$0xf] %v1415
        %1484 = vst [vmem:[%s282 + $0x74] sm:$0xf] %v1416
        %1485 = vst [vmem:[%s282 + $0x78] sm:$0xf] %v1417
        %1486 = vst [vmem:[%s282 + $0x7c] sm:$0xf] %v1418
        %1487 = vst [vmem:[%s282 + $0x80] sm:$0xf] %v1419
        %1488 = vst [vmem:[%s282 + $0x84] sm:$0xf] %v1420
        %s1489 = sand.u32 %s162, 1
        %s1490 = sand.u32 %s162, 1
        %s1491 = smul.addr %s1490, 136
        %s1492 = scalar_lea.vmem [#allocation3], %s1491
        // Predicated region
        $region45: #{fwd.1} parent=43 // pred_check
          %p1493 = pneg %p172
        $region46: #{fwd.1} parent=43 // pred_check_branch
          %1495 = sbr.rel (%p1493) target = $region48
        $region47: #{fwd.1} parent=43 // pred_region
          %s1496 = smul.u32 34, %s18
          %s1497 = ssub.s32 257, %s1496
          %p1498 = scmp.lt.s32.totalorder %s1497, 34
          %s1499 = scalar_select %p1498, %s1497, 34
          %s1500 = smul.u32 64, %s1499
          %p1501 = scmp.ne.s32.totalorder 0, %s1500
          %s1502 = smul.addr %s1496, 4
          %s1503 = scalar_lea.vmem %s6, %s1502
          // Predicated region
          $region49: #{fwd.1} parent=47 // pred_check
            %p1504 = pneg %p1501
          $region50: #{fwd.1} parent=47 // pred_check_branch
            %1506 = sbr.rel (%p1504) target = $region52
          $region51: #{fwd.1} parent=47 // pred_region
            // Predicated region
            $region53: #{fwd.1} parent=51 // pred_check
              _
            $region54: #{fwd.1} parent=51 // pred_check_branch
              %1508 = sbr.rel target = $region56
            $region55: #{fwd.1} parent=51 // pred_region
              // Predicated region
              $region75: #{fwd.1} parent=55 // pred_check
                _
              $region76: #{fwd.1} parent=55 // pred_check_branch
                %1624 = sbr.rel (0) target = $region78
              $region77: #{fwd.1} parent=55 // pred_region
                %s1626 = sdiv.u32.pop %s1499, 34
                %s1627 = srem.u32.pop %s1499, 34
                // While loop
                $region79: #{fwd.1} parent=77 // loop_pre_header
                  _
                $region80: #{fwd.1} parent=77 // loop_header
                  %s1629 = sphi 0, %s1631
                  %p1630 = scmp.ge.s32.totalorder %s1629, %s1626
                  %s1634 = sphi 0, %s1707
                  %s1635 = sphi %s1492, %s1710
                  %s1636 = sphi %s1503, %s1711
                $region81: #{fwd.1} parent=77 // loop_header_branch
                  %1633 = sbr.rel (%p1630) target = $region85
                $region82: #{fwd.1} parent=77 // loop_body
                  %v1637 = vld [vmem:[%s1635] sm:$0xf]
                  %1638 = vst [vmem:[%s1636] sm:$0xf] %v1637
                  %v1639 = vld [vmem:[%s1635 + $0x4] sm:$0xf]
                  %1640 = vst [vmem:[%s1636 + $0x4] sm:$0xf] %v1639
                  %v1641 = vld [vmem:[%s1635 + $0x8] sm:$0xf]
                  %1642 = vst [vmem:[%s1636 + $0x8] sm:$0xf] %v1641
                  %v1643 = vld [vmem:[%s1635 + $0xc] sm:$0xf]
                  %1644 = vst [vmem:[%s1636 + $0xc] sm:$0xf] %v1643
                  %v1645 = vld [vmem:[%s1635 + $0x10] sm:$0xf]
                  %1646 = vst [vmem:[%s1636 + $0x10] sm:$0xf] %v1645
                  %v1647 = vld [vmem:[%s1635 + $0x14] sm:$0xf]
                  %1648 = vst [vmem:[%s1636 + $0x14] sm:$0xf] %v1647
                  %v1649 = vld [vmem:[%s1635 + $0x18] sm:$0xf]
                  %1650 = vst [vmem:[%s1636 + $0x18] sm:$0xf] %v1649
                  %v1651 = vld [vmem:[%s1635 + $0x1c] sm:$0xf]
                  %1652 = vst [vmem:[%s1636 + $0x1c] sm:$0xf] %v1651
                  %v1653 = vld [vmem:[%s1635 + $0x20] sm:$0xf]
                  %1654 = vst [vmem:[%s1636 + $0x20] sm:$0xf] %v1653
                  %v1655 = vld [vmem:[%s1635 + $0x24] sm:$0xf]
                  %1656 = vst [vmem:[%s1636 + $0x24] sm:$0xf] %v1655
                  %v1657 = vld [vmem:[%s1635 + $0x28] sm:$0xf]
                  %1658 = vst [vmem:[%s1636 + $0x28] sm:$0xf] %v1657
                  %v1659 = vld [vmem:[%s1635 + $0x2c] sm:$0xf]
                  %1660 = vst [vmem:[%s1636 + $0x2c] sm:$0xf] %v1659
                  %v1661 = vld [vmem:[%s1635 + $0x30] sm:$0xf]
                  %1662 = vst [vmem:[%s1636 + $0x30] sm:$0xf] %v1661
                  %v1663 = vld [vmem:[%s1635 + $0x34] sm:$0xf]
                  %1664 = vst [vmem:[%s1636 + $0x34] sm:$0xf] %v1663
                  %v1665 = vld [vmem:[%s1635 + $0x38] sm:$0xf]
                  %1666 = vst [vmem:[%s1636 + $0x38] sm:$0xf] %v1665
                  %v1667 = vld [vmem:[%s1635 + $0x3c] sm:$0xf]
                  %1668 = vst [vmem:[%s1636 + $0x3c] sm:$0xf] %v1667
                  %v1669 = vld [vmem:[%s1635 + $0x40] sm:$0xf]
                  %1670 = vst [vmem:[%s1636 + $0x40] sm:$0xf] %v1669
                  %v1671 = vld [vmem:[%s1635 + $0x44] sm:$0xf]
                  %1672 = vst [vmem:[%s1636 + $0x44] sm:$0xf] %v1671
                  %v1673 = vld [vmem:[%s1635 + $0x48] sm:$0xf]
                  %1674 = vst [vmem:[%s1636 + $0x48] sm:$0xf] %v1673
                  %v1675 = vld [vmem:[%s1635 + $0x4c] sm:$0xf]
                  %1676 = vst [vmem:[%s1636 + $0x4c] sm:$0xf] %v1675
                  %v1677 = vld [vmem:[%s1635 + $0x50] sm:$0xf]
                  %1678 = vst [vmem:[%s1636 + $0x50] sm:$0xf] %v1677
                  %v1679 = vld [vmem:[%s1635 + $0x54] sm:$0xf]
                  %1680 = vst [vmem:[%s1636 + $0x54] sm:$0xf] %v1679
                  %v1681 = vld [vmem:[%s1635 + $0x58] sm:$0xf]
                  %1682 = vst [vmem:[%s1636 + $0x58] sm:$0xf] %v1681
                  %v1683 = vld [vmem:[%s1635 + $0x5c] sm:$0xf]
                  %1684 = vst [vmem:[%s1636 + $0x5c] sm:$0xf] %v1683
                  %v1685 = vld [vmem:[%s1635 + $0x60] sm:$0xf]
                  %1686 = vst [vmem:[%s1636 + $0x60] sm:$0xf] %v1685
                  %v1687 = vld [vmem:[%s1635 + $0x64] sm:$0xf]
                  %1688 = vst [vmem:[%s1636 + $0x64] sm:$0xf] %v1687
                  %v1689 = vld [vmem:[%s1635 + $0x68] sm:$0xf]
                  %1690 = vst [vmem:[%s1636 + $0x68] sm:$0xf] %v1689
                  %v1691 = vld [vmem:[%s1635 + $0x6c] sm:$0xf]
                  %1692 = vst [vmem:[%s1636 + $0x6c] sm:$0xf] %v1691
                  %v1693 = vld [vmem:[%s1635 + $0x70] sm:$0xf]
                  %1694 = vst [vmem:[%s1636 + $0x70] sm:$0xf] %v1693
                  %v1695 = vld [vmem:[%s1635 + $0x74] sm:$0xf]
                  %1696 = vst [vmem:[%s1636 + $0x74] sm:$0xf] %v1695
                  %v1697 = vld [vmem:[%s1635 + $0x78] sm:$0xf]
                  %1698 = vst [vmem:[%s1636 + $0x78] sm:$0xf] %v1697
                  %v1699 = vld [vmem:[%s1635 + $0x7c] sm:$0xf]
                  %1700 = vst [vmem:[%s1636 + $0x7c] sm:$0xf] %v1699
                  %v1701 = vld [vmem:[%s1635 + $0x80] sm:$0xf]
                  %1702 = vst [vmem:[%s1636 + $0x80] sm:$0xf] %v1701
                  %v1703 = vld [vmem:[%s1635 + $0x84] sm:$0xf]
                  %1704 = vst [vmem:[%s1636 + $0x84] sm:$0xf] %v1703
                  %s1705 = sadd.s32 1, %s1634
                  %p1706 = scmp.ge.s32.totalorder %s1705, %s1626
                  %s1707 = scalar_select %p1706, 0, %s1705
                  %s1708 = smul.u32 %s1707, 136
                  %s1709 = smul.u32 %s1707, 136
                  %s1710 = scalar_lea.vmem %s1492, %s1708 [#allocation3]
                  %s1711 = scalar_lea.vmem %s1503, %s1709
                $region83: #{fwd.1} parent=77 // loop_footer
                  %s1631 = sadd.s32 %s1629, 1
                $region84: #{fwd.1} parent=77 // loop_footer_branch
                  %1628 = sbr.rel target = $region80
                $region85: #{fwd.1} parent=77 // loop_exit
                  _
                %s1712 = sdiv.u32.pop %s1499, 34
                %s1713 = srem.u32.pop %s1499, 34
                %s1714 = smul.u32 %s1712, 34
                %s1715 = smul.u32 4, %s1714
                %s1716 = scalar_lea.vmem %s1492, %s1715 [#allocation3]
                %s1717 = smul.u32 4, %s1714
                %s1718 = scalar_lea.vmem %s1503, %s1717
                // While loop
                $region86: #{fwd.1} parent=77 // loop_pre_header
                  _
                $region87: #{fwd.1} parent=77 // loop_header
                  %s1720 = sphi 0, %s1722
                  %p1721 = scmp.ge.s32.totalorder %s1720, %s1713
                  %s1725 = sphi 0, %s1732
                  %s1726 = sphi %s1716, %s1735
                  %s1727 = sphi %s1718, %s1736
                $region88: #{fwd.1} parent=77 // loop_header_branch
                  %1724 = sbr.rel (%p1721) target = $region92
                $region89: #{fwd.1} parent=77 // loop_body
                  %v1728 = vld [vmem:[%s1726] sm:$0xf]
                  %1729 = vst [vmem:[%s1727] sm:$0xf] %v1728
                  %s1730 = sadd.s32 1, %s1725
                  %p1731 = scmp.ge.s32.totalorder %s1730, %s1713
                  %s1732 = scalar_select %p1731, 0, %s1730
                  %s1733 = smul.u32 %s1732, 4
                  %s1734 = smul.u32 %s1732, 4
                  %s1735 = scalar_lea.vmem %s1716, %s1733 [#allocation3]
                  %s1736 = scalar_lea.vmem %s1718, %s1734
                $region90: #{fwd.1} parent=77 // loop_footer
                  %s1722 = sadd.s32 %s1720, 1
                $region91: #{fwd.1} parent=77 // loop_footer_branch
                  %1719 = sbr.rel target = $region87
                $region92: #{fwd.1} parent=77 // loop_exit
                  _
              $region78: #{fwd.1} parent=55 // pred_fallthru
                _
            $region56: #{fwd.1} parent=51 // pred_fallthru
              _
            // Predicated region
            $region57: #{fwd.1} parent=51 // pred_check
              _
            $region58: #{fwd.1} parent=51 // pred_check_branch
              %1510 = sbr.rel (0) target = $region60
            $region59: #{fwd.1} parent=51 // pred_region
              %s1512 = sdiv.u32.pop %s1499, 34
              %s1513 = srem.u32.pop %s1499, 34
              // While loop
              $region61: #{fwd.1} parent=59 // loop_pre_header
                _
              $region62: #{fwd.1} parent=59 // loop_header
                %s1515 = sphi 0, %s1517
                %p1516 = scmp.ge.s32.totalorder %s1515, %s1512
                %s1520 = sphi 0, %s1593
                %s1521 = sphi %s1492, %s1596
                %s1522 = sphi %s1503, %s1597
              $region63: #{fwd.1} parent=59 // loop_header_branch
                %1519 = sbr.rel (%p1516) target = $region67
              $region64: #{fwd.1} parent=59 // loop_body
                %v1523 = vld [vmem:[%s1521] sm:$0xf]
                %1524 = vst [vmem:[%s1522] sm:$0xf] %v1523
                %v1525 = vld [vmem:[%s1521 + $0x4] sm:$0xf]
                %1526 = vst [vmem:[%s1522 + $0x4] sm:$0xf] %v1525
                %v1527 = vld [vmem:[%s1521 + $0x8] sm:$0xf]
                %1528 = vst [vmem:[%s1522 + $0x8] sm:$0xf] %v1527
                %v1529 = vld [vmem:[%s1521 + $0xc] sm:$0xf]
                %1530 = vst [vmem:[%s1522 + $0xc] sm:$0xf] %v1529
                %v1531 = vld [vmem:[%s1521 + $0x10] sm:$0xf]
                %1532 = vst [vmem:[%s1522 + $0x10] sm:$0xf] %v1531
                %v1533 = vld [vmem:[%s1521 + $0x14] sm:$0xf]
                %1534 = vst [vmem:[%s1522 + $0x14] sm:$0xf] %v1533
                %v1535 = vld [vmem:[%s1521 + $0x18] sm:$0xf]
                %1536 = vst [vmem:[%s1522 + $0x18] sm:$0xf] %v1535
                %v1537 = vld [vmem:[%s1521 + $0x1c] sm:$0xf]
                %1538 = vst [vmem:[%s1522 + $0x1c] sm:$0xf] %v1537
                %v1539 = vld [vmem:[%s1521 + $0x20] sm:$0xf]
                %1540 = vst [vmem:[%s1522 + $0x20] sm:$0xf] %v1539
                %v1541 = vld [vmem:[%s1521 + $0x24] sm:$0xf]
                %1542 = vst [vmem:[%s1522 + $0x24] sm:$0xf] %v1541
                %v1543 = vld [vmem:[%s1521 + $0x28] sm:$0xf]
                %1544 = vst [vmem:[%s1522 + $0x28] sm:$0xf] %v1543
                %v1545 = vld [vmem:[%s1521 + $0x2c] sm:$0xf]
                %1546 = vst [vmem:[%s1522 + $0x2c] sm:$0xf] %v1545
                %v1547 = vld [vmem:[%s1521 + $0x30] sm:$0xf]
                %1548 = vst [vmem:[%s1522 + $0x30] sm:$0xf] %v1547
                %v1549 = vld [vmem:[%s1521 + $0x34] sm:$0xf]
                %1550 = vst [vmem:[%s1522 + $0x34] sm:$0xf] %v1549
                %v1551 = vld [vmem:[%s1521 + $0x38] sm:$0xf]
                %1552 = vst [vmem:[%s1522 + $0x38] sm:$0xf] %v1551
                %v1553 = vld [vmem:[%s1521 + $0x3c] sm:$0xf]
                %1554 = vst [vmem:[%s1522 + $0x3c] sm:$0xf] %v1553
                %v1555 = vld [vmem:[%s1521 + $0x40] sm:$0xf]
                %1556 = vst [vmem:[%s1522 + $0x40] sm:$0xf] %v1555
                %v1557 = vld [vmem:[%s1521 + $0x44] sm:$0xf]
                %1558 = vst [vmem:[%s1522 + $0x44] sm:$0xf] %v1557
                %v1559 = vld [vmem:[%s1521 + $0x48] sm:$0xf]
                %1560 = vst [vmem:[%s1522 + $0x48] sm:$0xf] %v1559
                %v1561 = vld [vmem:[%s1521 + $0x4c] sm:$0xf]
                %1562 = vst [vmem:[%s1522 + $0x4c] sm:$0xf] %v1561
                %v1563 = vld [vmem:[%s1521 + $0x50] sm:$0xf]
                %1564 = vst [vmem:[%s1522 + $0x50] sm:$0xf] %v1563
                %v1565 = vld [vmem:[%s1521 + $0x54] sm:$0xf]
                %1566 = vst [vmem:[%s1522 + $0x54] sm:$0xf] %v1565
                %v1567 = vld [vmem:[%s1521 + $0x58] sm:$0xf]
                %1568 = vst [vmem:[%s1522 + $0x58] sm:$0xf] %v1567
                %v1569 = vld [vmem:[%s1521 + $0x5c] sm:$0xf]
                %1570 = vst [vmem:[%s1522 + $0x5c] sm:$0xf] %v1569
                %v1571 = vld [vmem:[%s1521 + $0x60] sm:$0xf]
                %1572 = vst [vmem:[%s1522 + $0x60] sm:$0xf] %v1571
                %v1573 = vld [vmem:[%s1521 + $0x64] sm:$0xf]
                %1574 = vst [vmem:[%s1522 + $0x64] sm:$0xf] %v1573
                %v1575 = vld [vmem:[%s1521 + $0x68] sm:$0xf]
                %1576 = vst [vmem:[%s1522 + $0x68] sm:$0xf] %v1575
                %v1577 = vld [vmem:[%s1521 + $0x6c] sm:$0xf]
                %1578 = vst [vmem:[%s1522 + $0x6c] sm:$0xf] %v1577
                %v1579 = vld [vmem:[%s1521 + $0x70] sm:$0xf]
                %1580 = vst [vmem:[%s1522 + $0x70] sm:$0xf] %v1579
                %v1581 = vld [vmem:[%s1521 + $0x74] sm:$0xf]
                %1582 = vst [vmem:[%s1522 + $0x74] sm:$0xf] %v1581
                %v1583 = vld [vmem:[%s1521 + $0x78] sm:$0xf]
                %1584 = vst [vmem:[%s1522 + $0x78] sm:$0xf] %v1583
                %v1585 = vld [vmem:[%s1521 + $0x7c] sm:$0xf]
                %1586 = vst [vmem:[%s1522 + $0x7c] sm:$0xf] %v1585
                %v1587 = vld [vmem:[%s1521 + $0x80] sm:$0xf]
                %1588 = vst [vmem:[%s1522 + $0x80] sm:$0xf] %v1587
                %v1589 = vld [vmem:[%s1521 + $0x84] sm:$0xf]
                %1590 = vst [vmem:[%s1522 + $0x84] sm:$0xf] %v1589
                %s1591 = sadd.s32 1, %s1520
                %p1592 = scmp.ge.s32.totalorder %s1591, %s1512
                %s1593 = scalar_select %p1592, 0, %s1591
                %s1594 = smul.u32 %s1593, 136
                %s1595 = smul.u32 %s1593, 136
                %s1596 = scalar_lea.vmem %s1492, %s1594 [#allocation3]
                %s1597 = scalar_lea.vmem %s1503, %s1595
              $region65: #{fwd.1} parent=59 // loop_footer
                %s1517 = sadd.s32 %s1515, 1
              $region66: #{fwd.1} parent=59 // loop_footer_branch
                %1514 = sbr.rel target = $region62
              $region67: #{fwd.1} parent=59 // loop_exit
                _
              %s1598 = sdiv.u32.pop %s1499, 34
              %s1599 = srem.u32.pop %s1499, 34
              %s1600 = smul.u32 %s1598, 34
              %s1601 = smul.u32 4, %s1600
              %s1602 = scalar_lea.vmem %s1492, %s1601 [#allocation3]
              %s1603 = smul.u32 4, %s1600
              %s1604 = scalar_lea.vmem %s1503, %s1603
              // While loop
              $region68: #{fwd.1} parent=59 // loop_pre_header
                _
              $region69: #{fwd.1} parent=59 // loop_header
                %s1606 = sphi 0, %s1608
                %p1607 = scmp.ge.s32.totalorder %s1606, %s1599
                %s1611 = sphi 0, %s1618
                %s1612 = sphi %s1602, %s1621
                %s1613 = sphi %s1604, %s1622
              $region70: #{fwd.1} parent=59 // loop_header_branch
                %1610 = sbr.rel (%p1607) target = $region74
              $region71: #{fwd.1} parent=59 // loop_body
                %v1614 = vld [vmem:[%s1612] sm:$0xf]
                %1615 = vst [vmem:[%s1613] sm:$0xf] %v1614
                %s1616 = sadd.s32 1, %s1611
                %p1617 = scmp.ge.s32.totalorder %s1616, %s1599
                %s1618 = scalar_select %p1617, 0, %s1616
                %s1619 = smul.u32 %s1618, 4
                %s1620 = smul.u32 %s1618, 4
                %s1621 = scalar_lea.vmem %s1602, %s1619 [#allocation3]
                %s1622 = scalar_lea.vmem %s1604, %s1620
              $region72: #{fwd.1} parent=59 // loop_footer
                %s1608 = sadd.s32 %s1606, 1
              $region73: #{fwd.1} parent=59 // loop_footer_branch
                %1605 = sbr.rel target = $region69
              $region74: #{fwd.1} parent=59 // loop_exit
                _
            $region60: #{fwd.1} parent=51 // pred_fallthru
              _
          $region52: #{fwd.1} parent=47 // pred_fallthru
            _
          %1737 = vnop
        $region48: #{fwd.1} parent=43 // pred_fallthru
          _
      $region44: #{fwd.1} parent=5 // pred_fallthru
        _
      %p1738 = scmp.le.s32.totalorder 2, %s13
      // Predicated region
      $region93: #{fwd.1} parent=5 // pred_check
        %p1739 = pneg %p1738
      $region94: #{fwd.1} parent=5 // pred_check_branch
        %1741 = sbr.rel (%p1739) target = $region96
      $region95: #{fwd.1} parent=5 // pred_region
        %s1742 = ssub.s32 %s13, 2
        // Predicated region
        $region97: #{fwd.1} parent=95 // pred_check
          %p1743 = pneg %p178
        $region98: #{fwd.1} parent=95 // pred_check_branch
          %1745 = sbr.rel (%p1743) target = $region100
        $region99: #{fwd.1} parent=95 // pred_region
          %s1746 = sand.u32 %s163, 1
          %s1747 = sand.u32 %s163, 1
          %s1748 = smul.addr %s1747, 136
          %s1749 = scalar_lea.vmem [#allocation3], %s1748
        $region100: #{fwd.1} parent=95 // pred_fallthru
          _
      $region96: #{fwd.1} parent=5 // pred_fallthru
        _
    $region6: #{fwd.1} parent=1 // loop_footer
      %s17 = sadd.s32 1, %s13
    $region7: #{fwd.1} parent=1 // loop_footer_branch
      %12 = sbr.rel target = $region3
    $region8: #{fwd.1} parent=1 // loop_exit
      _

</llo_original>
